<compile_context>
chip_gen: v7x
topology: tpu7x:2x2x1
jax: 0.10.0
libtpu: 0.0.40
codegen_flags: <defaults>
</compile_context>

<pallas_src>
import jax
import jax.numpy as jnp
from jax.experimental import pallas as pl
from jax.experimental.pallas import tpu as pltpu


def gru_chunk_kernel(x_ref, wx_zr_ref, wx_n_ref, b_zr_ref, b_n_ref,
                     wh_zr_ref, wh_n_ref, h_hist_ref, h_carry):
    """Processes one T_TILE chunk of the sequence.

    x_ref:      [T_TILE, B, D]   raw inputs for this chunk (seq-major)
    wx_zr_ref:  [D, 2H]          x-side weights for z|r, fused
    wx_n_ref:   [D, H]           x-side weights for the candidate gate
    b_zr_ref:   [1, 2H]          biases for z|r, fused
    b_n_ref:    [1, H]           bias for the candidate gate
    wh_zr_ref:  [H, 2H]          h-side weights for z|r, fused
    wh_n_ref:   [H, H]           h-side weights for the candidate gate
    h_hist_ref: [T_TILE, B, H]   output slice of the h history
    h_carry:    [B, H]  VMEM scratch, hidden state carried across chunks
    """
    t_tile, batch, in_dim = x_ref.shape
    hidden = wh_n_ref.shape[1]

    @pl.when(pl.program_id(0) == 0)
    def _():
        h_carry[...] = jnp.zeros_like(h_carry)

    # x-side pre-activations for the whole chunk (hoisted out of the serial
    # recurrence): two lane-aligned MXU pushes against resident weights.
    # Keeping zr and n in separate tensors keeps every later add lane-aligned
    # with the [B, H]-shaped h-side matmul results (no XLU rotate per step).
    x2d = x_ref[...].reshape(t_tile * batch, in_dim)
    xp_zr = (jnp.dot(x2d, wx_zr_ref[...], preferred_element_type=jnp.float32)
             + b_zr_ref[...]).reshape(t_tile, batch, 2 * hidden)
    xp_n = (jnp.dot(x2d, wx_n_ref[...], preferred_element_type=jnp.float32)
            + b_n_ref[...]).reshape(t_tile, batch, hidden)

    # Hoist the h-side weights out of the time loop (loaded once into vregs).
    wh_zr = wh_zr_ref[...]                               # [H, 2H]
    wh_n = wh_n_ref[...]                                 # [H, H]
    # TODO(synk): at larger H, stage wh_zr/wh_n in the MXU across steps with
    # pltpu.matmul_push_rhs / matmul_acc_lhs / matmul_pop; at H=32 the RHS is
    # far below one MXU tile so the explicit path buys nothing.

    h = h_carry[...]
    # Statically unrolled recurrence over the chunk (T_TILE = 4..8); the only
    # serial dependency per step is the two small h-side matmuls.
    for t in range(t_tile):
        # One MXU push covers both z and r (lane-dense 2H output).
        zr = jax.nn.sigmoid(
            jnp.dot(h, wh_zr, preferred_element_type=jnp.float32) + xp_zr[t])
        z = zr[:, :hidden]
        r = zr[:, hidden:]
        # Candidate gate needs r*h, so it is a separate (unavoidable) push.
        n = jnp.tanh(
            jnp.dot(r * h, wh_n, preferred_element_type=jnp.float32) + xp_n[t])
        # h + z*(n - h)  ==  (1-z)*h + z*n, one fewer VPU op / shorter chain.
        h = h + z * (n - h)
        h_hist_ref[t] = h.astype(h_hist_ref.dtype)

    h_carry[...] = h


def _pick_t_tile(seq_len, max_tile=4):
    """Largest divisor of seq_len that is <= max_tile (per-chunk unroll 4-8).

    For very long sequences, size T_TILE so the double-buffered x chunk plus
    the h_hist chunk stay well under the scoped VMEM limit (32 MiB default on
    v6e/v7x; v7x has only 64 MiB physical)."""
    for cand in range(min(seq_len, max_tile), 0, -1):
        if seq_len % cand == 0:
            return cand
    return 1


@jax.jit
def gru_forward(x_btd, wz, bz, wr, br, wn, bn):
    """x_btd: [B, T, D].  Weights are stored pre-transposed as [H+D, H] with
    rows [:H] acting on h and rows [H:] on x (concat order (h, x) as in the
    PyTorch module); biases are [1, H].  Returns h_history [T, B, H]."""
    B, T, D = x_btd.shape
    H = wz.shape[1]
    if T == 0:  # edge case: empty sequence -> empty (defined) history
        return jnp.zeros((0, B, H), jnp.float32)

    # ---- split / fuse parameters (tiny trace-time ops under jit) ----------
    wx_zr = jnp.concatenate([wz[H:], wr[H:]], axis=1)             # [D, 2H]
    wx_n = wn[H:]                                                 # [D, H]
    b_zr = jnp.concatenate([bz, br], axis=1)                      # [1, 2H]
    b_n = bn                                                      # [1, H]
    wh_zr = jnp.concatenate([wz[:H], wr[:H]], axis=1)             # [H, 2H]
    wh_n = wn[:H]                                                 # [H, H]
    # TODO(synk): at real scale cast wx_*/wh_* (and x) to bf16 for the MXU
    # pushes (keep preferred_element_type=f32); kept f32 here so the toy-shape
    # result stays within tolerance of the f32 reference.

    x_tbd = jnp.transpose(x_btd, (1, 0, 2))                       # [T, B, D]

    t_tile = _pick_t_tile(T)
    grid = (T // t_tile,)

    return pl.pallas_call(
        gru_chunk_kernel,
        out_shape=jax.ShapeDtypeStruct((T, B, H), jnp.float32),
        grid=grid,
        in_specs=[
            pl.BlockSpec((t_tile, B, D), lambda i: (i, 0, 0)),    # x chunk
            pl.BlockSpec((D, 2 * H), lambda i: (0, 0)),           # wx_zr
            pl.BlockSpec((D, H), lambda i: (0, 0)),               # wx_n
            pl.BlockSpec((1, 2 * H), lambda i: (0, 0)),           # b_zr
            pl.BlockSpec((1, H), lambda i: (0, 0)),               # b_n
            pl.BlockSpec((H, 2 * H), lambda i: (0, 0)),           # wh_zr
            pl.BlockSpec((H, H), lambda i: (0, 0)),               # wh_n
        ],
        out_specs=pl.BlockSpec((t_tile, B, H), lambda i: (i, 0, 0)),
        scratch_shapes=[pltpu.VMEM((B, H), jnp.float32)],         # h carry
        compiler_params=pltpu.CompilerParams(
            # Time-chunk axis carries state in scratch -> must stay serial.
            dimension_semantics=("arbitrary",)),
    )(x_tbd, wx_zr, wx_n, b_zr, b_n, wh_zr, wh_n)


def gru_ref(x_btd, wz, bz, wr, br, wn, bn):
    """Pure-JAX reference mirroring the PyTorch module's forward().

    Dots pinned to HIGHEST precision so this is a true-f32 baseline."""
    hp = jax.lax.Precision.HIGHEST
    B, T, D = x_btd.shape
    H = wz.shape[1]
    h = jnp.zeros((B, H), jnp.float32)
    hs = []
    for t in range(T):
        xt = x_btd[:, t, :]
        hx = jnp.concatenate([h, xt], axis=1)
        z = jax.nn.sigmoid(jnp.dot(hx, wz, precision=hp) + bz)
        r = jax.nn.sigmoid(jnp.dot(hx, wr, precision=hp) + br)
        n = jnp.tanh(
            jnp.dot(jnp.concatenate([r * h, xt], axis=1), wn, precision=hp)
            + bn)
        h = (1.0 - z) * h + z * n
        hs.append(h)
    return jnp.stack(hs, axis=0)                                  # [T, B, H]


def init_params(key, input_size, hidden_size):
    """Deterministic init matching nn.Linear's U(-1/sqrt(fan_in), 1/sqrt(fan_in)).

    Each weight is stored pre-transposed as [hidden+input, hidden]."""
    fan_in = input_size + hidden_size
    bound = 1.0 / jnp.sqrt(jnp.float32(fan_in))
    ks = jax.random.split(key, 6)
    mk_w = lambda k: jax.random.uniform(k, (fan_in, hidden_size), jnp.float32,
                                        -bound, bound)
    mk_b = lambda k: jax.random.uniform(k, (1, hidden_size), jnp.float32,
                                        -bound, bound)
    return (mk_w(ks[0]), mk_b(ks[1]),   # in_hidden_layer_1 -> z
            mk_w(ks[2]), mk_b(ks[3]),   # in_hidden_layer_2 -> r
            mk_w(ks[4]), mk_b(ks[5]))   # in_hidden_layer   -> candidate n


if __name__ == "__main__":
    # TODO(synk): decode() / hidden_out_layer is not part of forward(); not kernelized.
    B, T, D, H = 2, 8, 16, 32   # batch, seq, input_size, hidden_size
    # With T_TILE=4 this runs as a 2-chunk grid, exercising the cross-chunk
    # VMEM hidden-state carry.

    key = jax.random.PRNGKey(0)
    k_x, k_p = jax.random.split(key)
    x = jax.random.normal(k_x, (B, T, D), jnp.float32)
    params = init_params(k_p, D, H)

    h_hist = jax.block_until_ready(gru_forward(x, *params))
    h_ref = gru_ref(x, *params)

    assert h_hist.shape == (T, B, H)
    assert jnp.allclose(h_hist, h_ref, atol=1e-4, rtol=1e-4)

    print("KERNEL_OK")
</pallas_src>

<mosaic_0001>
module attributes {stable_mosaic.version = 11 : i64} {
  func.func @gru_chunk_kernel(%arg0: i32, %arg1: memref<4x2x16xf32, #tpu.memory_space<vmem>>, %arg2: memref<16x64xf32, #tpu.memory_space<vmem>>, %arg3: memref<16x32xf32, #tpu.memory_space<vmem>>, %arg4: memref<1x64xf32, #tpu.memory_space<vmem>>, %arg5: memref<1x32xf32, #tpu.memory_space<vmem>>, %arg6: memref<32x64xf32, #tpu.memory_space<vmem>>, %arg7: memref<32x32xf32, #tpu.memory_space<vmem>>, %arg8: memref<4x2x32xf32, #tpu.memory_space<vmem>>, %arg9: memref<2x32xf32, #tpu.memory_space<vmem>>) attributes {dimension_semantics = [#tpu.dimension_semantics<arbitrary>], iteration_bounds = array<i64: 2>, scalar_prefetch = 0 : i64, scratch_operands = 1 : i64, tpu.core_type = #tpu.core_type<tc>, window_params = [{transform_indices = @transform_0, window_bounds = array<i64: 4, 2, 16>}, {pipeline_mode = #tpu.pipeline_mode<synchronous>, transform_indices = @transform_1, window_bounds = array<i64: 16, 64>}, {pipeline_mode = #tpu.pipeline_mode<synchronous>, transform_indices = @transform_2, window_bounds = array<i64: 16, 32>}, {pipeline_mode = #tpu.pipeline_mode<synchronous>, transform_indices = @transform_3, window_bounds = array<i64: 1, 64>}, {pipeline_mode = #tpu.pipeline_mode<synchronous>, transform_indices = @transform_4, window_bounds = array<i64: 1, 32>}, {pipeline_mode = #tpu.pipeline_mode<synchronous>, transform_indices = @transform_5, window_bounds = array<i64: 32, 64>}, {pipeline_mode = #tpu.pipeline_mode<synchronous>, transform_indices = @transform_6, window_bounds = array<i64: 32, 32>}, {transform_indices = @transform_7, window_bounds = array<i64: 4, 2, 32>}]} {
    %c0_i32 = arith.constant 0 : i32
    %0 = arith.cmpi eq, %arg0, %c0_i32 : i32
    %1 = arith.extui %0 : i1 to i32
    %c0_i32_0 = arith.constant 0 : i32
    %2 = arith.cmpi ne, %1, %c0_i32_0 : i32
    scf.if %2 {
      %cst_41 = arith.constant 0.000000e+00 : f32
      %113 = vector.broadcast %cst_41 : f32 to vector<2x32xf32>
      %c0_42 = arith.constant 0 : index
      %c0_43 = arith.constant 0 : index
      %114 = vector.load %arg9[%c0_42, %c0_43] : memref<2x32xf32, #tpu.memory_space<vmem>>, vector<2x32xf32>
      tpu.vector_store %arg9[%c0_42, %c0_43], %113 {strides = array<i32>} : memref<2x32xf32, #tpu.memory_space<vmem>>, vector<2x32xf32>,
    } else {
    }
    %c0 = arith.constant 0 : index
    %c0_1 = arith.constant 0 : index
    %c0_2 = arith.constant 0 : index
    %3 = vector.load %arg1[%c0, %c0_1, %c0_2] : memref<4x2x16xf32, #tpu.memory_space<vmem>>, vector<4x2x16xf32>
    %4 = vector.shape_cast %3 : vector<4x2x16xf32> to vector<8x16xf32>
    %c0_3 = arith.constant 0 : index
    %c0_4 = arith.constant 0 : index
    %5 = vector.load %arg2[%c0_3, %c0_4] : memref<16x64xf32, #tpu.memory_space<vmem>>, vector<16x64xf32>
    %cst = arith.constant dense<0.000000e+00> : vector<8x64xf32>
    %6 = tpu.matmul %4, %5, %cst {dimension_numbers = #tpu.dot_dimension_numbers<[1], [0], [0], [1], [0, 0, 1, 1], [], []>} : vector<8x16xf32>, vector<16x64xf32>, vector<8x64xf32> -> vector<8x64xf32>
    %c0_5 = arith.constant 0 : index
    %c0_6 = arith.constant 0 : index
    %7 = vector.load %arg4[%c0_5, %c0_6] : memref<1x64xf32, #tpu.memory_space<vmem>>, vector<1x64xf32>
    %8 = vector.broadcast %7 : vector<1x64xf32> to vector<8x64xf32>
    %9 = arith.addf %6, %8 : vector<8x64xf32>
    %10 = vector.shape_cast %9 : vector<8x64xf32> to vector<4x2x64xf32>
    %c0_7 = arith.constant 0 : index
    %c0_8 = arith.constant 0 : index
    %11 = vector.load %arg3[%c0_7, %c0_8] : memref<16x32xf32, #tpu.memory_space<vmem>>, vector<16x32xf32>
    %cst_9 = arith.constant dense<0.000000e+00> : vector<8x32xf32>
    %12 = tpu.matmul %4, %11, %cst_9 {dimension_numbers = #tpu.dot_dimension_numbers<[1], [0], [0], [1], [0, 0, 1, 1], [], []>} : vector<8x16xf32>, vector<16x32xf32>, vector<8x32xf32> -> vector<8x32xf32>
    %c0_10 = arith.constant 0 : index
    %c0_11 = arith.constant 0 : index
    %13 = vector.load %arg5[%c0_10, %c0_11] : memref<1x32xf32, #tpu.memory_space<vmem>>, vector<1x32xf32>
    %14 = vector.broadcast %13 : vector<1x32xf32> to vector<8x32xf32>
    %15 = arith.addf %12, %14 : vector<8x32xf32>
    %16 = vector.shape_cast %15 : vector<8x32xf32> to vector<4x2x32xf32>
    %c0_12 = arith.constant 0 : index
    %c0_13 = arith.constant 0 : index
    %17 = vector.load %arg6[%c0_12, %c0_13] : memref<32x64xf32, #tpu.memory_space<vmem>>, vector<32x64xf32>
    %c0_14 = arith.constant 0 : index
    %c0_15 = arith.constant 0 : index
    %18 = vector.load %arg7[%c0_14, %c0_15] : memref<32x32xf32, #tpu.memory_space<vmem>>, vector<32x32xf32>
    %c0_16 = arith.constant 0 : index
    %c0_17 = arith.constant 0 : index
    %19 = vector.load %arg9[%c0_16, %c0_17] : memref<2x32xf32, #tpu.memory_space<vmem>>, vector<2x32xf32>
    %cst_18 = arith.constant dense<0.000000e+00> : vector<2x64xf32>
    %20 = tpu.matmul %19, %17, %cst_18 {dimension_numbers = #tpu.dot_dimension_numbers<[1], [0], [0], [1], [0, 0, 1, 1], [], []>} : vector<2x32xf32>, vector<32x64xf32>, vector<2x64xf32> -> vector<2x64xf32>
    %21 = vector.extract_strided_slice %10 {offsets = [0, 0, 0], sizes = [1, 2, 64], strides = [1, 1, 1]} : vector<4x2x64xf32> to vector<1x2x64xf32>
    %22 = vector.shape_cast %21 : vector<1x2x64xf32> to vector<2x64xf32>
    %23 = arith.addf %20, %22 : vector<2x64xf32>
    %24 = arith.negf %23 : vector<2x64xf32>
    %25 = math.exp %24 : vector<2x64xf32>
    %cst_19 = arith.constant 1.000000e+00 : f32
    %26 = vector.broadcast %cst_19 : f32 to vector<2x64xf32>
    %27 = arith.addf %26, %25 : vector<2x64xf32>
    %28 = arith.divf %26, %27 : vector<2x64xf32>
    %29 = vector.extract_strided_slice %28 {offsets = [0, 0], sizes = [2, 32], strides = [1, 1]} : vector<2x64xf32> to vector<2x32xf32>
    %30 = vector.extract_strided_slice %28 {offsets = [0, 32], sizes = [2, 32], strides = [1, 1]} : vector<2x64xf32> to vector<2x32xf32>
    %31 = arith.mulf %30, %19 : vector<2x32xf32>
    %cst_20 = arith.constant dense<0.000000e+00> : vector<2x32xf32>
    %32 = tpu.matmul %31, %18, %cst_20 {dimension_numbers = #tpu.dot_dimension_numbers<[1], [0], [0], [1], [0, 0, 1, 1], [], []>} : vector<2x32xf32>, vector<32x32xf32>, vector<2x32xf32> -> vector<2x32xf32>
    %33 = vector.extract_strided_slice %16 {offsets = [0, 0, 0], sizes = [1, 2, 32], strides = [1, 1, 1]} : vector<4x2x32xf32> to vector<1x2x32xf32>
    %34 = vector.shape_cast %33 : vector<1x2x32xf32> to vector<2x32xf32>
    %35 = arith.addf %32, %34 : vector<2x32xf32>
    %36 = math.tanh %35 : vector<2x32xf32>
    %37 = arith.subf %36, %19 : vector<2x32xf32>
    %38 = arith.mulf %29, %37 : vector<2x32xf32>
    %39 = arith.addf %19, %38 : vector<2x32xf32>
    %c0_21 = arith.constant 0 : index
    %c0_22 = arith.constant 0 : index
    %c0_23 = arith.constant 0 : index
    %40 = vector.load %arg8[%c0_21, %c0_22, %c0_23] : memref<4x2x32xf32, #tpu.memory_space<vmem>>, vector<1x2x32xf32>
    %41 = vector.shape_cast %40 : vector<1x2x32xf32> to vector<2x32xf32>
    %42 = vector.shape_cast %39 : vector<2x32xf32> to vector<1x2x32xf32>
    tpu.vector_store %arg8[%c0_21, %c0_22, %c0_23], %42 {strides = array<i32>} : memref<4x2x32xf32, #tpu.memory_space<vmem>>, vector<1x2x32xf32>,
    %cst_24 = arith.constant dense<0.000000e+00> : vector<2x64xf32>
    %43 = tpu.matmul %39, %17, %cst_24 {dimension_numbers = #tpu.dot_dimension_numbers<[1], [0], [0], [1], [0, 0, 1, 1], [], []>} : vector<2x32xf32>, vector<32x64xf32>, vector<2x64xf32> -> vector<2x64xf32>
    %44 = vector.extract_strided_slice %10 {offsets = [1, 0, 0], sizes = [1, 2, 64], strides = [1, 1, 1]} : vector<4x2x64xf32> to vector<1x2x64xf32>
    %45 = vector.shape_cast %44 : vector<1x2x64xf32> to vector<2x64xf32>
    %46 = arith.addf %43, %45 : vector<2x64xf32>
    %47 = arith.negf %46 : vector<2x64xf32>
    %48 = math.exp %47 : vector<2x64xf32>
    %cst_25 = arith.constant 1.000000e+00 : f32
    %49 = vector.broadcast %cst_25 : f32 to vector<2x64xf32>
    %50 = arith.addf %49, %48 : vector<2x64xf32>
    %51 = arith.divf %49, %50 : vector<2x64xf32>
    %52 = vector.extract_strided_slice %51 {offsets = [0, 0], sizes = [2, 32], strides = [1, 1]} : vector<2x64xf32> to vector<2x32xf32>
    %53 = vector.extract_strided_slice %51 {offsets = [0, 32], sizes = [2, 32], strides = [1, 1]} : vector<2x64xf32> to vector<2x32xf32>
    %54 = arith.mulf %53, %39 : vector<2x32xf32>
    %cst_26 = arith.constant dense<0.000000e+00> : vector<2x32xf32>
    %55 = tpu.matmul %54, %18, %cst_26 {dimension_numbers = #tpu.dot_dimension_numbers<[1], [0], [0], [1], [0, 0, 1, 1], [], []>} : vector<2x32xf32>, vector<32x32xf32>, vector<2x32xf32> -> vector<2x32xf32>
    %56 = vector.extract_strided_slice %16 {offsets = [1, 0, 0], sizes = [1, 2, 32], strides = [1, 1, 1]} : vector<4x2x32xf32> to vector<1x2x32xf32>
    %57 = vector.shape_cast %56 : vector<1x2x32xf32> to vector<2x32xf32>
    %58 = arith.addf %55, %57 : vector<2x32xf32>
    %59 = math.tanh %58 : vector<2x32xf32>
    %60 = arith.subf %59, %39 : vector<2x32xf32>
    %61 = arith.mulf %52, %60 : vector<2x32xf32>
    %62 = arith.addf %39, %61 : vector<2x32xf32>
    %c1 = arith.constant 1 : index
    %c0_27 = arith.constant 0 : index
    %c0_28 = arith.constant 0 : index
    %63 = vector.load %arg8[%c1, %c0_27, %c0_28] : memref<4x2x32xf32, #tpu.memory_space<vmem>>, vector<1x2x32xf32>
    %64 = vector.shape_cast %63 : vector<1x2x32xf32> to vector<2x32xf32>
    %65 = vector.shape_cast %62 : vector<2x32xf32> to vector<1x2x32xf32>
    tpu.vector_store %arg8[%c1, %c0_27, %c0_28], %65 {strides = array<i32>} : memref<4x2x32xf32, #tpu.memory_space<vmem>>, vector<1x2x32xf32>,
    %cst_29 = arith.constant dense<0.000000e+00> : vector<2x64xf32>
    %66 = tpu.matmul %62, %17, %cst_29 {dimension_numbers = #tpu.dot_dimension_numbers<[1], [0], [0], [1], [0, 0, 1, 1], [], []>} : vector<2x32xf32>, vector<32x64xf32>, vector<2x64xf32> -> vector<2x64xf32>
    %67 = vector.extract_strided_slice %10 {offsets = [2, 0, 0], sizes = [1, 2, 64], strides = [1, 1, 1]} : vector<4x2x64xf32> to vector<1x2x64xf32>
    %68 = vector.shape_cast %67 : vector<1x2x64xf32> to vector<2x64xf32>
    %69 = arith.addf %66, %68 : vector<2x64xf32>
    %70 = arith.negf %69 : vector<2x64xf32>
    %71 = math.exp %70 : vector<2x64xf32>
    %cst_30 = arith.constant 1.000000e+00 : f32
    %72 = vector.broadcast %cst_30 : f32 to vector<2x64xf32>
    %73 = arith.addf %72, %71 : vector<2x64xf32>
    %74 = arith.divf %72, %73 : vector<2x64xf32>
    %75 = vector.extract_strided_slice %74 {offsets = [0, 0], sizes = [2, 32], strides = [1, 1]} : vector<2x64xf32> to vector<2x32xf32>
    %76 = vector.extract_strided_slice %74 {offsets = [0, 32], sizes = [2, 32], strides = [1, 1]} : vector<2x64xf32> to vector<2x32xf32>
    %77 = arith.mulf %76, %62 : vector<2x32xf32>
    %cst_31 = arith.constant dense<0.000000e+00> : vector<2x32xf32>
    %78 = tpu.matmul %77, %18, %cst_31 {dimension_numbers = #tpu.dot_dimension_numbers<[1], [0], [0], [1], [0, 0, 1, 1], [], []>} : vector<2x32xf32>, vector<32x32xf32>, vector<2x32xf32> -> vector<2x32xf32>
    %79 = vector.extract_strided_slice %16 {offsets = [2, 0, 0], sizes = [1, 2, 32], strides = [1, 1, 1]} : vector<4x2x32xf32> to vector<1x2x32xf32>
    %80 = vector.shape_cast %79 : vector<1x2x32xf32> to vector<2x32xf32>
    %81 = arith.addf %78, %80 : vector<2x32xf32>
    %82 = math.tanh %81 : vector<2x32xf32>
    %83 = arith.subf %82, %62 : vector<2x32xf32>
    %84 = arith.mulf %75, %83 : vector<2x32xf32>
    %85 = arith.addf %62, %84 : vector<2x32xf32>
    %c2 = arith.constant 2 : index
    %c0_32 = arith.constant 0 : index
    %c0_33 = arith.constant 0 : index
    %86 = vector.load %arg8[%c2, %c0_32, %c0_33] : memref<4x2x32xf32, #tpu.memory_space<vmem>>, vector<1x2x32xf32>
    %87 = vector.shape_cast %86 : vector<1x2x32xf32> to vector<2x32xf32>
    %88 = vector.shape_cast %85 : vector<2x32xf32> to vector<1x2x32xf32>
    tpu.vector_store %arg8[%c2, %c0_32, %c0_33], %88 {strides = array<i32>} : memref<4x2x32xf32, #tpu.memory_space<vmem>>, vector<1x2x32xf32>,
    %cst_34 = arith.constant dense<0.000000e+00> : vector<2x64xf32>
    %89 = tpu.matmul %85, %17, %cst_34 {dimension_numbers = #tpu.dot_dimension_numbers<[1], [0], [0], [1], [0, 0, 1, 1], [], []>} : vector<2x32xf32>, vector<32x64xf32>, vector<2x64xf32> -> vector<2x64xf32>
    %90 = vector.extract_strided_slice %10 {offsets = [3, 0, 0], sizes = [1, 2, 64], strides = [1, 1, 1]} : vector<4x2x64xf32> to vector<1x2x64xf32>
    %91 = vector.shape_cast %90 : vector<1x2x64xf32> to vector<2x64xf32>
    %92 = arith.addf %89, %91 : vector<2x64xf32>
    %93 = arith.negf %92 : vector<2x64xf32>
    %94 = math.exp %93 : vector<2x64xf32>
    %cst_35 = arith.constant 1.000000e+00 : f32
    %95 = vector.broadcast %cst_35 : f32 to vector<2x64xf32>
    %96 = arith.addf %95, %94 : vector<2x64xf32>
    %97 = arith.divf %95, %96 : vector<2x64xf32>
    %98 = vector.extract_strided_slice %97 {offsets = [0, 0], sizes = [2, 32], strides = [1, 1]} : vector<2x64xf32> to vector<2x32xf32>
    %99 = vector.extract_strided_slice %97 {offsets = [0, 32], sizes = [2, 32], strides = [1, 1]} : vector<2x64xf32> to vector<2x32xf32>
    %100 = arith.mulf %99, %85 : vector<2x32xf32>
    %cst_36 = arith.constant dense<0.000000e+00> : vector<2x32xf32>
    %101 = tpu.matmul %100, %18, %cst_36 {dimension_numbers = #tpu.dot_dimension_numbers<[1], [0], [0], [1], [0, 0, 1, 1], [], []>} : vector<2x32xf32>, vector<32x32xf32>, vector<2x32xf32> -> vector<2x32xf32>
    %102 = vector.extract_strided_slice %16 {offsets = [3, 0, 0], sizes = [1, 2, 32], strides = [1, 1, 1]} : vector<4x2x32xf32> to vector<1x2x32xf32>
    %103 = vector.shape_cast %102 : vector<1x2x32xf32> to vector<2x32xf32>
    %104 = arith.addf %101, %103 : vector<2x32xf32>
    %105 = math.tanh %104 : vector<2x32xf32>
    %106 = arith.subf %105, %85 : vector<2x32xf32>
    %107 = arith.mulf %98, %106 : vector<2x32xf32>
    %108 = arith.addf %85, %107 : vector<2x32xf32>
    %c3 = arith.constant 3 : index
    %c0_37 = arith.constant 0 : index
    %c0_38 = arith.constant 0 : index
    %109 = vector.load %arg8[%c3, %c0_37, %c0_38] : memref<4x2x32xf32, #tpu.memory_space<vmem>>, vector<1x2x32xf32>
    %110 = vector.shape_cast %109 : vector<1x2x32xf32> to vector<2x32xf32>
    %111 = vector.shape_cast %108 : vector<2x32xf32> to vector<1x2x32xf32>
    tpu.vector_store %arg8[%c3, %c0_37, %c0_38], %111 {strides = array<i32>} : memref<4x2x32xf32, #tpu.memory_space<vmem>>, vector<1x2x32xf32>,
    %c0_39 = arith.constant 0 : index
    %c0_40 = arith.constant 0 : index
    %112 = vector.load %arg9[%c0_39, %c0_40] : memref<2x32xf32, #tpu.memory_space<vmem>>, vector<2x32xf32>
    tpu.vector_store %arg9[%c0_39, %c0_40], %108 {strides = array<i32>} : memref<2x32xf32, #tpu.memory_space<vmem>>, vector<2x32xf32>,
    return
  }
  func.func @transform_0(%arg0: i32) -> (i32, i32, i32) {
    %c0_i32 = arith.constant 0 : i32
    %c0_i32_0 = arith.constant 0 : i32
    %c0_i32_1 = arith.constant 0 : i32
    return %arg0, %c0_i32, %c0_i32_0 : i32, i32, i32
  }
  func.func @transform_1(%arg0: i32) -> (i32, i32) {
    %c0_i32 = arith.constant 0 : i32
    %c0_i32_0 = arith.constant 0 : i32
    %c0_i32_1 = arith.constant 0 : i32
    return %c0_i32, %c0_i32_0 : i32, i32
  }
  func.func @transform_2(%arg0: i32) -> (i32, i32) {
    %c0_i32 = arith.constant 0 : i32
    %c0_i32_0 = arith.constant 0 : i32
    %c0_i32_1 = arith.constant 0 : i32
    return %c0_i32, %c0_i32_0 : i32, i32
  }
  func.func @transform_3(%arg0: i32) -> (i32, i32) {
    %c0_i32 = arith.constant 0 : i32
    %c0_i32_0 = arith.constant 0 : i32
    %c0_i32_1 = arith.constant 0 : i32
    return %c0_i32, %c0_i32_0 : i32, i32
  }
  func.func @transform_4(%arg0: i32) -> (i32, i32) {
    %c0_i32 = arith.constant 0 : i32
    %c0_i32_0 = arith.constant 0 : i32
    %c0_i32_1 = arith.constant 0 : i32
    return %c0_i32, %c0_i32_0 : i32, i32
  }
  func.func @transform_5(%arg0: i32) -> (i32, i32) {
    %c0_i32 = arith.constant 0 : i32
    %c0_i32_0 = arith.constant 0 : i32
    %c0_i32_1 = arith.constant 0 : i32
    return %c0_i32, %c0_i32_0 : i32, i32
  }
  func.func @transform_6(%arg0: i32) -> (i32, i32) {
    %c0_i32 = arith.constant 0 : i32
    %c0_i32_0 = arith.constant 0 : i32
    %c0_i32_1 = arith.constant 0 : i32
    return %c0_i32, %c0_i32_0 : i32, i32
  }
  func.func @transform_7(%arg0: i32) -> (i32, i32, i32) {
    %c0_i32 = arith.constant 0 : i32
    %c0_i32_0 = arith.constant 0 : i32
    %c0_i32_1 = arith.constant 0 : i32
    return %arg0, %c0_i32, %c0_i32_0 : i32, i32, i32
  }
}

</mosaic_0001>

<llo_original>
// kernel: gru_forward.1
$region0: #{gru_forward.1}
  #allocation0 [shape = 'u32[]', space=smem, size = 0x4, offset = 0x4, fixed_abs, tag = 'smem constant byte address 0x4 - core index']
  #allocation1 [shape = 'u32[144,128]{1,0:T(1,128)}', space=vmem, size = 0x12000, scoped, tag = 'internal scratch']
  #allocation2 [shape = 'f32[2,32]{1,0:T(2,128)}', space=vmem, size = 0x400, scoped, tag = 'scratch operand']
  %s0 = inlined_call_operand.vmem [shape: f32[8,2,16], index: 0, kind: input, shape index: {}]
  %s1 = inlined_call_operand.vmem [shape: f32[16,64], index: 1, kind: input, shape index: {}]
  %s2 = inlined_call_operand.vmem [shape: f32[16,32], index: 2, kind: input, shape index: {}]
  %s3 = inlined_call_operand.vmem [shape: f32[1,64], index: 3, kind: input, shape index: {}]
  %s4 = inlined_call_operand.vmem [shape: f32[1,32], index: 4, kind: input, shape index: {}]
  %s5 = inlined_call_operand.vmem [shape: f32[32,64], index: 5, kind: input, shape index: {}]
  %s6 = inlined_call_operand.vmem [shape: f32[32,32], index: 6, kind: input, shape index: {}]
  %s7 = inlined_call_operand.hbm [shape: f32[8,2,32], index: 7, kind: output, shape index: {}]
  %s8 = sld [smem:[#allocation0]]
  $region65: #{gru_forward.1} parent=0
    _
  %s10 = ssub.s32 1, %s8
  %s11 = scalar_select 0, %s10, %s8
  $region1: #{gru_forward.1} parent=0
    #allocation3 [shape = 'u8[8192]{0}', space=vmem, size = 0x2000, scoped, tag = 'output window, operand 0']
    #allocation4 [shape = 's32[2]{0}', space=sflag, size = 0x8, scoped, tag = 'scoped memory for gru_forward.1']
    %12 = vsyncpa [#allocation4], 0
    %s13 = scalar_lea.sflag [#allocation4], 1
    %14 = vsyncpa %s13, 0
    loop: start=0, step=1, limit=4
    $region2: #{gru_forward.1} parent=1 // loop_pre_header
      _
    $region3: #{gru_forward.1} parent=1 // loop_header
      %s16 = sphi 0, %s20
      %p17 = scmp.ge.s32.totalorder %s16, 4
      %s26 = sphi 0, %s28
      %s29 = sphi 0, %s26
      %s30 = sphi 0, %s29
      %s46 = sphi 0, %s30
      %s50 = sphi 0, %s50
      %s52 = sphi 0, %s50
      %s53 = sphi 0, %s52
      %s67 = sphi 0, %s53
      %s71 = sphi 0, %s71
      %s73 = sphi 0, %s71
      %s74 = sphi 0, %s73
      %s88 = sphi 0, %s74
      %s92 = sphi 0, %s92
      %s94 = sphi 0, %s92
      %s95 = sphi 0, %s94
      %s109 = sphi 0, %s95
      %s113 = sphi 0, %s113
      %s115 = sphi 0, %s113
      %s116 = sphi 0, %s115
      %s130 = sphi 0, %s116
      %s134 = sphi 0, %s134
      %s136 = sphi 0, %s134
      %s137 = sphi 0, %s136
      %s151 = sphi 0, %s137
      %s155 = sphi 0, %s155
      %s157 = sphi 0, %s155
      %s158 = sphi 0, %s157
      %s172 = sphi 0, %s158
      %s178 = sphi 0, %s180
      %s181 = sphi 0, %s178
      %s182 = sphi 0, %s181
      %s198 = sphi 0, %s182
    $region4: #{gru_forward.1} parent=1 // loop_header_branch
      %19 = sbr.rel (%p17) target = $region8
    $region5: #{gru_forward.1} parent=1 // loop_body
      %s21 = ssub.s32 %s16, 1
      %s22 = ssub.s32 %s16, 2
      %s23 = sadd.s32 %s16, 1
      %s24 = ssub.s32 %s16, %s23
      %p25 = scmp.eq.s32.totalorder %s24, 0
      %s27 = sadd.s32 %s26, 1
      %s28 = scalar_select %p25, %s26, %s27
      %p31 = pneg %p25
      %p32 = scmp.eq.s32.totalorder %s16, 1
      %p33 = por %p31, %p32
      %p34 = scmp.ne.s32.totalorder %s26, %s29
      %p35 = scmp.eq.s32.totalorder %s16, 0
      %p36 = por %p34, %p35
      %p37 = scmp.ne.s32.totalorder %s26, %s29
      %p38 = scmp.eq.s32.totalorder %s21, 1
      %p39 = por %p37, %p38
      %p40 = scmp.ne.s32.totalorder %s29, %s30
      %p41 = scmp.eq.s32.totalorder %s21, 0
      %p42 = por %p40, %p41
      %p43 = scmp.ne.s32.totalorder %s29, %s30
      %p44 = scmp.eq.s32.totalorder %s22, 1
      %p45 = por %p43, %p44
      %p47 = scmp.ne.s32.totalorder %s30, %s46
      %p48 = scmp.eq.s32.totalorder %s22, 0
      %p49 = por %p47, %p48
      %s51 = sadd.s32 %s50, 1
      %p54 = scmp.eq.s32.totalorder %s16, 1
      %p55 = scmp.ne.s32.totalorder %s50, %s52
      %p56 = scmp.eq.s32.totalorder %s16, 0
      %p57 = por %p55, %p56
      %p58 = scmp.ne.s32.totalorder %s50, %s52
      %p59 = scmp.eq.s32.totalorder %s21, 1
      %p60 = por %p58, %p59
      %p61 = scmp.ne.s32.totalorder %s52, %s53
      %p62 = scmp.eq.s32.totalorder %s21, 0
      %p63 = por %p61, %p62
      %p64 = scmp.ne.s32.totalorder %s52, %s53
      %p65 = scmp.eq.s32.totalorder %s22, 1
      %p66 = por %p64, %p65
      %p68 = scmp.ne.s32.totalorder %s53, %s67
      %p69 = scmp.eq.s32.totalorder %s22, 0
      %p70 = por %p68, %p69
      %s72 = sadd.s32 %s71, 1
      %p75 = scmp.eq.s32.totalorder %s16, 1
      %p76 = scmp.ne.s32.totalorder %s71, %s73
      %p77 = scmp.eq.s32.totalorder %s16, 0
      %p78 = por %p76, %p77
      %p79 = scmp.ne.s32.totalorder %s71, %s73
      %p80 = scmp.eq.s32.totalorder %s21, 1
      %p81 = por %p79, %p80
      %p82 = scmp.ne.s32.totalorder %s73, %s74
      %p83 = scmp.eq.s32.totalorder %s21, 0
      %p84 = por %p82, %p83
      %p85 = scmp.ne.s32.totalorder %s73, %s74
      %p86 = scmp.eq.s32.totalorder %s22, 1
      %p87 = por %p85, %p86
      %p89 = scmp.ne.s32.totalorder %s74, %s88
      %p90 = scmp.eq.s32.totalorder %s22, 0
      %p91 = por %p89, %p90
      %s93 = sadd.s32 %s92, 1
      %p96 = scmp.eq.s32.totalorder %s16, 1
      %p97 = scmp.ne.s32.totalorder %s92, %s94
      %p98 = scmp.eq.s32.totalorder %s16, 0
      %p99 = por %p97, %p98
      %p100 = scmp.ne.s32.totalorder %s92, %s94
      %p101 = scmp.eq.s32.totalorder %s21, 1
      %p102 = por %p100, %p101
      %p103 = scmp.ne.s32.totalorder %s94, %s95
      %p104 = scmp.eq.s32.totalorder %s21, 0
      %p105 = por %p103, %p104
      %p106 = scmp.ne.s32.totalorder %s94, %s95
      %p107 = scmp.eq.s32.totalorder %s22, 1
      %p108 = por %p106, %p107
      %p110 = scmp.ne.s32.totalorder %s95, %s109
      %p111 = scmp.eq.s32.totalorder %s22, 0
      %p112 = por %p110, %p111
      %s114 = sadd.s32 %s113, 1
      %p117 = scmp.eq.s32.totalorder %s16, 1
      %p118 = scmp.ne.s32.totalorder %s113, %s115
      %p119 = scmp.eq.s32.totalorder %s16, 0
      %p120 = por %p118, %p119
      %p121 = scmp.ne.s32.totalorder %s113, %s115
      %p122 = scmp.eq.s32.totalorder %s21, 1
      %p123 = por %p121, %p122
      %p124 = scmp.ne.s32.totalorder %s115, %s116
      %p125 = scmp.eq.s32.totalorder %s21, 0
      %p126 = por %p124, %p125
      %p127 = scmp.ne.s32.totalorder %s115, %s116
      %p128 = scmp.eq.s32.totalorder %s22, 1
      %p129 = por %p127, %p128
      %p131 = scmp.ne.s32.totalorder %s116, %s130
      %p132 = scmp.eq.s32.totalorder %s22, 0
      %p133 = por %p131, %p132
      %s135 = sadd.s32 %s134, 1
      %p138 = scmp.eq.s32.totalorder %s16, 1
      %p139 = scmp.ne.s32.totalorder %s134, %s136
      %p140 = scmp.eq.s32.totalorder %s16, 0
      %p141 = por %p139, %p140
      %p142 = scmp.ne.s32.totalorder %s134, %s136
      %p143 = scmp.eq.s32.totalorder %s21, 1
      %p144 = por %p142, %p143
      %p145 = scmp.ne.s32.totalorder %s136, %s137
      %p146 = scmp.eq.s32.totalorder %s21, 0
      %p147 = por %p145, %p146
      %p148 = scmp.ne.s32.totalorder %s136, %s137
      %p149 = scmp.eq.s32.totalorder %s22, 1
      %p150 = por %p148, %p149
      %p152 = scmp.ne.s32.totalorder %s137, %s151
      %p153 = scmp.eq.s32.totalorder %s22, 0
      %p154 = por %p152, %p153
      %s156 = sadd.s32 %s155, 1
      %p159 = scmp.eq.s32.totalorder %s16, 1
      %p160 = scmp.ne.s32.totalorder %s155, %s157
      %p161 = scmp.eq.s32.totalorder %s16, 0
      %p162 = por %p160, %p161
      %p163 = scmp.ne.s32.totalorder %s155, %s157
      %p164 = scmp.eq.s32.totalorder %s21, 1
      %p165 = por %p163, %p164
      %p166 = scmp.ne.s32.totalorder %s157, %s158
      %p167 = scmp.eq.s32.totalorder %s21, 0
      %p168 = por %p166, %p167
      %p169 = scmp.ne.s32.totalorder %s157, %s158
      %p170 = scmp.eq.s32.totalorder %s22, 1
      %p171 = por %p169, %p170
      %p173 = scmp.ne.s32.totalorder %s158, %s172
      %p174 = scmp.eq.s32.totalorder %s22, 0
      %p175 = por %p173, %p174
      %s176 = ssub.s32 %s16, %s23
      %p177 = scmp.eq.s32.totalorder %s176, 0
      %s179 = sadd.s32 %s178, 1
      %s180 = scalar_select %p177, %s178, %s179
      %p183 = pneg %p177
      %p184 = scmp.eq.s32.totalorder %s16, 1
      %p185 = por %p183, %p184
      %p186 = scmp.ne.s32.totalorder %s178, %s181
      %p187 = scmp.eq.s32.totalorder %s16, 0
      %p188 = por %p186, %p187
      %p189 = scmp.ne.s32.totalorder %s178, %s181
      %p190 = scmp.eq.s32.totalorder %s21, 1
      %p191 = por %p189, %p190
      %p192 = scmp.ne.s32.totalorder %s181, %s182
      %p193 = scmp.eq.s32.totalorder %s21, 0
      %p194 = por %p192, %p193
      %p195 = scmp.ne.s32.totalorder %s181, %s182
      %p196 = scmp.eq.s32.totalorder %s22, 1
      %p197 = por %p195, %p196
      %p199 = scmp.ne.s32.totalorder %s182, %s198
      %p200 = scmp.eq.s32.totalorder %s22, 0
      %p201 = por %p199, %p200
      %p202 = scmp.le.s32.totalorder 1, %s16
      %p203 = scmp.lt.s32.totalorder %s16, 3
      %p204 = pnand %p202, %p203
      %p205 = pneg %p204
      // Predicated region
      $region9: #{gru_forward.1} parent=5 // pred_check
        _
      $region10: #{gru_forward.1} parent=5 // pred_check_branch
        %207 = sbr.rel (%p204) target = $region12
      $region11: #{gru_forward.1} parent=5 // pred_region
        %s208 = ssub.s32 %s16, 1
        // Predicated region
        $region13: #{gru_forward.1} parent=11 // pred_check
          %p209 = pneg %p63
        $region14: #{gru_forward.1} parent=11 // pred_check_branch
          %211 = sbr.rel (%p209) target = $region16
        $region15: #{gru_forward.1} parent=11 // pred_region
          _
        $region16: #{gru_forward.1} parent=11 // pred_fallthru
          _
        // Predicated region
        $region17: #{gru_forward.1} parent=11 // pred_check
          %p212 = pneg %p84
        $region18: #{gru_forward.1} parent=11 // pred_check_branch
          %214 = sbr.rel (%p212) target = $region20
        $region19: #{gru_forward.1} parent=11 // pred_region
          _
        $region20: #{gru_forward.1} parent=11 // pred_fallthru
          _
        // Predicated region
        $region21: #{gru_forward.1} parent=11 // pred_check
          %p215 = pneg %p105
        $region22: #{gru_forward.1} parent=11 // pred_check_branch
          %217 = sbr.rel (%p215) target = $region24
        $region23: #{gru_forward.1} parent=11 // pred_region
          _
        $region24: #{gru_forward.1} parent=11 // pred_fallthru
          _
        // Predicated region
        $region25: #{gru_forward.1} parent=11 // pred_check
          %p218 = pneg %p126
        $region26: #{gru_forward.1} parent=11 // pred_check_branch
          %220 = sbr.rel (%p218) target = $region28
        $region27: #{gru_forward.1} parent=11 // pred_region
          _
        $region28: #{gru_forward.1} parent=11 // pred_fallthru
          _
        // Predicated region
        $region29: #{gru_forward.1} parent=11 // pred_check
          %p221 = pneg %p147
        $region30: #{gru_forward.1} parent=11 // pred_check_branch
          %223 = sbr.rel (%p221) target = $region32
        $region31: #{gru_forward.1} parent=11 // pred_region
          _
        $region32: #{gru_forward.1} parent=11 // pred_fallthru
          _
        // Predicated region
        $region33: #{gru_forward.1} parent=11 // pred_check
          %p224 = pneg %p168
        $region34: #{gru_forward.1} parent=11 // pred_check_branch
          %226 = sbr.rel (%p224) target = $region36
        $region35: #{gru_forward.1} parent=11 // pred_region
          _
        $region36: #{gru_forward.1} parent=11 // pred_fallthru
          _
      $region12: #{gru_forward.1} parent=5 // pred_fallthru
        _
      %p227 = scmp.lt.s32.totalorder %s16, 2
      // Predicated region
      $region37: #{gru_forward.1} parent=5 // pred_check
        %p228 = pneg %p227
      $region38: #{gru_forward.1} parent=5 // pred_check_branch
        %230 = sbr.rel (%p228) target = $region40
      $region39: #{gru_forward.1} parent=5 // pred_region
        // Predicated region
        $region41: #{gru_forward.1} parent=39 // pred_check
          %p231 = pneg %p36
        $region42: #{gru_forward.1} parent=39 // pred_check_branch
          %233 = sbr.rel (%p231) target = $region44
        $region43: #{gru_forward.1} parent=39 // pred_region
          %s234 = smul.u32 4, %s16
          %p235 = scmp.lt.s32.totalorder %s234, 7
          %s236 = scalar_select %p235, %s234, 7
          %s237 = smul.addr %s236, 2
          %s238 = scalar_lea.vmem %s0, %s237
          %s239 = smul.u32 4, %s16
        $region44: #{gru_forward.1} parent=39 // pred_fallthru
          _
      $region40: #{gru_forward.1} parent=5 // pred_fallthru
        _
      %p240 = scmp.le.s32.totalorder 1, %s16
      %p241 = scmp.lt.s32.totalorder %s16, 3
      %p242 = pnand %p240, %p241
      %p243 = pneg %p242
      // Predicated region
      $region45: #{gru_forward.1} parent=5 // pred_check
        _
      $region46: #{gru_forward.1} parent=5 // pred_check_branch
        %245 = sbr.rel (%p242) target = $region48
      $region47: #{gru_forward.1} parent=5 // pred_region
        %s246 = ssub.s32 %s16, 1
        %s247 = smul.u32 4, %s21
        %p248 = scmp.lt.s32.totalorder %s247, 7
        %s249 = scalar_select %p248, %s247, 7
        %s250 = smul.addr %s249, 2
        %s251 = scalar_lea.vmem %s0, %s250
        %p252 = pneg %p42
        %p253 = pneg %p39
        %p254 = pneg %p63
        %p255 = pneg %p60
        %p256 = pneg %p84
        %p257 = pneg %p81
        %p258 = pneg %p105
        %p259 = pneg %p102
        %p260 = pneg %p126
        %p261 = pneg %p123
        %p262 = pneg %p147
        %p263 = pneg %p144
        %p264 = pneg %p168
        %p265 = pneg %p165
        %p266 = pneg %p194
        %p267 = pneg %p191
        %s268 = sand.u32 %s181, 1
        %s269 = scalar_lea.sflag [#allocation4], %s268
        %s270 = sand.u32 %s181, 1
        %s271 = smul.addr %s270, 8
        %s272 = scalar_lea.vmem [#allocation3], %s271
        %s273 = smul.u32 4, %s21
        %p274 = scmp.lt.s32.totalorder %s273, 7
        %s275 = scalar_select %p274, %s273, 7
        %s276 = smul.addr %s275, 2
        %s277 = scalar_lea.vmem %s0, %s276
        %s278 = smul.u32 4, %s21
        %s279 = smul.u32 4, %s21
        %p280 = scmp.eq.s32.totalorder %s21, 0
        // Predicated region
        $region49: #{gru_forward.1} parent=47 // pred_check
          %p281 = pneg %p280
        $region50: #{gru_forward.1} parent=47 // pred_check_branch
          %283 = sbr.rel (%p281) target = $region52
        $region51: #{gru_forward.1} parent=47 // pred_region
          %vm284 = vcmask 254976
          %285 = vst.msk [vmem:[#allocation2] sm:$0x3] %vm284, 0.0
        $region52: #{gru_forward.1} parent=47 // pred_fallthru
          _
        %v286 = vld [vmem:[%s277] sm:$0x3]
        %v287 = vld [vmem:[%s277 + $0x2] sm:$0x3]
        %v288 = vld [vmem:[%s277 + $0x4] sm:$0x3]
        %v289 = vld [vmem:[%s277 + $0x6] sm:$0x3]
        %v290 = vld [vmem:[%s1] sm:$0xff]
        %v291 = vld [vmem:[%s1 + $0x8] sm:$0xff]
        %v292 = vld [vmem:[%s3] sm:$0x1]
        %v294 = vlaneseq
        %v295 = vshrl.u32 %v294, 7
        %v296 = vsub.s32 0, %v295
        %v297 = vrot.slane %v292, %v296
        %v303 = vcombine.low %v286, %v287
        %v304 = vcombine.low %v288, %v289
        %v306 = vunpack.c.l.s4 1983009808
        %v307 = vunpack.c.0.s8 %v306
        %v308 = vlaneseq
        %v309 = vshrl.u32 %v308, 7
        %v310 = vsub.s32 %v307, %v309
        %v311 = vrot.slane %v303, %v310
        %v313 = vunpack.c.l.s4 1983009808
        %v314 = vunpack.c.0.s8 %v313
        %v315 = vlaneseq
        %v316 = vshrl.u32 %v315, 7
        %v317 = vsub.s32 %v314, %v316
        %v318 = vrot.slane %v304, %v317
        %v319 = vcombine.low %v311, %v318
        %vm320 = vcmask 130048
        %v321 = vsel %vm320, %v319, 0
        %323 = vmatprep.subr.mxu0 0.0
        %324 = vmatpush1.msra.mxu0 %v290
        %325 = vmatprep.subr.mxu0 0.0
        %326 = vmatpush1.msra.mxu0 %v291
        %327 = vmatprep.subr.mxu0 0.0
        %328 = vmatpush1.msra.mxu0 0.0
        %329 = vmatprep.subr.mxu0 0.0
        %330 = vmatpush1.msra.mxu0 0.0
        %331 = vmatprep.subr.mxu0 0.0
        %332 = vmatpush1.msra.mxu0 0.0
        %333 = vmatprep.subr.mxu0 0.0
        %334 = vmatpush1.msra.mxu0 0.0
        %335 = vmatprep.subr.mxu0 0.0
        %336 = vmatpush1.msra.mxu0 0.0
        %337 = vmatprep.subr.mxu0 0.0
        %338 = vmatpush1.msra.mxu0 0.0
        %339 = vmatprep.subr.mxu0 0.0
        %340 = vmatpush1.msra.mxu0 0.0
        %341 = vmatprep.subr.mxu0 0.0
        %342 = vmatpush1.msra.mxu0 0.0
        %343 = vmatprep.subr.mxu0 0.0
        %344 = vmatpush1.msra.mxu0 0.0
        %345 = vmatprep.subr.mxu0 0.0
        %346 = vmatpush1.msra.mxu0 0.0
        %347 = vmatprep.subr.mxu0 0.0
        %348 = vmatpush1.msra.mxu0 0.0
        %349 = vmatprep.subr.mxu0 0.0
        %350 = vmatpush1.msra.mxu0 0.0
        %351 = vmatprep.subr.mxu0 0.0
        %352 = vmatpush1.msra.mxu0 0.0
        %353 = vmatprep.subr.mxu0 0.0
        %354 = vmatpush1.msra.mxu0 0.0
        %355 = vmatprep.subr.mxu0 0.0
        %356 = vmatpush1.msra.mxu0 0.0
        %357 = vmatprep.subr.mxu0 0.0
        %358 = vmatpush1.msra.mxu0 0.0
        %359 = vmatprep.subr.mxu0 0.0
        %360 = vmatpush1.msra.mxu0 0.0
        %361 = vmatprep.subr.mxu0 0.0
        %362 = vmatpush1.msra.mxu0 0.0
        %363 = vmatprep.subr.mxu0 0.0
        %364 = vmatpush1.msra.mxu0 0.0
        %365 = vmatprep.subr.mxu0 0.0
        %366 = vmatpush1.msra.mxu0 0.0
        %367 = vmatprep.subr.mxu0 0.0
        %368 = vmatpush1.msra.mxu0 0.0
        %369 = vmatprep.subr.mxu0 0.0
        %370 = vmatpush1.msra.mxu0 0.0
        %371 = vmatprep.subr.mxu0 0.0
        %372 = vmatpush1.msra.mxu0 0.0
        %373 = vmatprep.subr.mxu0 0.0
        %374 = vmatpush1.msra.mxu0 0.0
        %375 = vmatprep.subr.mxu0 0.0
        %376 = vmatpush1.msra.mxu0 0.0
        %377 = vmatprep.subr.mxu0 0.0
        %378 = vmatpush1.msra.mxu0 0.0
        %379 = vmatprep.subr.mxu0 0.0
        %380 = vmatpush1.msra.mxu0 0.0
        %381 = vmatprep.subr.mxu0 0.0
        %382 = vmatpush1.msra.mxu0 0.0
        %383 = vmatprep.subr.mxu0 0.0
        %384 = vmatpush1.msra.mxu0 0.0
        %385 = vmatprep.subr.mxu0 0.0
        %386 = vmatpush1.msra.mxu0 0.0
        %387 = vmatprep.mubr.f32.mxu0 0.0
        %388 = vmatmul.mubr.f32.gmra.mrb[0].mxu0 %v321
        %v389 = vpop.f32.mrb[0].mxu0
        %v390 = vadd.f32 %v297, %v389
        %v391 = vpop.f32.mrb[0].mxu0
        %392 = vdwg.mxu0
        %v394 = vcombine.high %v390, %v390
        %v396 = vunpack.c.l.s4 1983009808
        %v397 = vunpack.c.0.s8 %v396
        %v398 = vlaneseq
        %v399 = vshrl.u32 %v398, 7
        %v400 = vsub.s32 %v397, %v399
        %v401 = vrot.slane %v390, %v400
        %v403 = vunpack.c.l.s4 1983009808
        %v404 = vunpack.c.0.s8 %v403
        %v405 = vlaneseq
        %v406 = vshrl.u32 %v405, 7
        %v407 = vsub.s32 %v404, %v406
        %v408 = vrot.slane %v394, %v407
        %v409 = vcombine.high %v401, %v401
        %v410 = vcombine.high %v408, %v408
        %v415 = vld [vmem:[%s2] sm:$0xff]
        %v416 = vld [vmem:[%s2 + $0x8] sm:$0xff]
        %v417 = vld [vmem:[%s4] sm:$0x1]
        %v419 = vlaneseq
        %v420 = vshrl.u32 %v419, 7
        %v421 = vsub.s32 0, %v420
        %v422 = vrot.slane %v417, %v421
        %424 = vmatprep.subr.mxu0 0.0
        %425 = vmatpush1.msra.mxu0 %v415
        %426 = vmatprep.subr.mxu0 0.0
        %427 = vmatpush1.msra.mxu0 %v416
        %428 = vmatprep.subr.mxu0 0.0
        %429 = vmatpush1.msra.mxu0 0.0
        %430 = vmatprep.subr.mxu0 0.0
        %431 = vmatpush1.msra.mxu0 0.0
        %432 = vmatprep.subr.mxu0 0.0
        %433 = vmatpush1.msra.mxu0 0.0
        %434 = vmatprep.subr.mxu0 0.0
        %435 = vmatpush1.msra.mxu0 0.0
        %436 = vmatprep.subr.mxu0 0.0
        %437 = vmatpush1.msra.mxu0 0.0
        %438 = vmatprep.subr.mxu0 0.0
        %439 = vmatpush1.msra.mxu0 0.0
        %440 = vmatprep.subr.mxu0 0.0
        %441 = vmatpush1.msra.mxu0 0.0
        %442 = vmatprep.subr.mxu0 0.0
        %443 = vmatpush1.msra.mxu0 0.0
        %444 = vmatprep.subr.mxu0 0.0
        %445 = vmatpush1.msra.mxu0 0.0
        %446 = vmatprep.subr.mxu0 0.0
        %447 = vmatpush1.msra.mxu0 0.0
        %448 = vmatprep.subr.mxu0 0.0
        %449 = vmatpush1.msra.mxu0 0.0
        %450 = vmatprep.subr.mxu0 0.0
        %451 = vmatpush1.msra.mxu0 0.0
        %452 = vmatprep.subr.mxu0 0.0
        %453 = vmatpush1.msra.mxu0 0.0
        %454 = vmatprep.subr.mxu0 0.0
        %455 = vmatpush1.msra.mxu0 0.0
        %456 = vmatprep.subr.mxu0 0.0
        %457 = vmatpush1.msra.mxu0 0.0
        %458 = vmatprep.subr.mxu0 0.0
        %459 = vmatpush1.msra.mxu0 0.0
        %460 = vmatprep.subr.mxu0 0.0
        %461 = vmatpush1.msra.mxu0 0.0
        %462 = vmatprep.subr.mxu0 0.0
        %463 = vmatpush1.msra.mxu0 0.0
        %464 = vmatprep.subr.mxu0 0.0
        %465 = vmatpush1.msra.mxu0 0.0
        %466 = vmatprep.subr.mxu0 0.0
        %467 = vmatpush1.msra.mxu0 0.0
        %468 = vmatprep.subr.mxu0 0.0
        %469 = vmatpush1.msra.mxu0 0.0
        %470 = vmatprep.subr.mxu0 0.0
        %471 = vmatpush1.msra.mxu0 0.0
        %472 = vmatprep.subr.mxu0 0.0
        %473 = vmatpush1.msra.mxu0 0.0
        %474 = vmatprep.subr.mxu0 0.0
        %475 = vmatpush1.msra.mxu0 0.0
        %476 = vmatprep.subr.mxu0 0.0
        %477 = vmatpush1.msra.mxu0 0.0
        %478 = vmatprep.subr.mxu0 0.0
        %479 = vmatpush1.msra.mxu0 0.0
        %480 = vmatprep.subr.mxu0 0.0
        %481 = vmatpush1.msra.mxu0 0.0
        %482 = vmatprep.subr.mxu0 0.0
        %483 = vmatpush1.msra.mxu0 0.0
        %484 = vmatprep.subr.mxu0 0.0
        %485 = vmatpush1.msra.mxu0 0.0
        %486 = vmatprep.subr.mxu0 0.0
        %487 = vmatpush1.msra.mxu0 0.0
        %488 = vmatprep.mubr.f32.mxu0 0.0
        %489 = vmatmul.mubr.f32.gmra.mrb[0].mxu0 %v321
        %v490 = vpop.f32.mrb[0].mxu0
        %v491 = vadd.f32 %v422, %v490
        %v492 = vpop.f32.mrb[0].mxu0
        %493 = vdwg.mxu0
        %v495 = vcombine.high %v491, %v491
        %v497 = vunpack.c.l.s4 1983009808
        %v498 = vunpack.c.0.s8 %v497
        %v499 = vlaneseq
        %v500 = vshrl.u32 %v499, 7
        %v501 = vsub.s32 %v498, %v500
        %v502 = vrot.slane %v491, %v501
        %v504 = vunpack.c.l.s4 1983009808
        %v505 = vunpack.c.0.s8 %v504
        %v506 = vlaneseq
        %v507 = vshrl.u32 %v506, 7
        %v508 = vsub.s32 %v505, %v507
        %v509 = vrot.slane %v495, %v508
        %v510 = vcombine.high %v502, %v502
        %v511 = vcombine.high %v509, %v509
        %v516 = vld [vmem:[%s5] sm:$0xff]
        %v517 = vld [vmem:[%s5 + $0x8] sm:$0xff]
        %v518 = vld [vmem:[%s5 + $0x10] sm:$0xff]
        %v519 = vld [vmem:[%s5 + $0x18] sm:$0xff]
        %v520 = vld [vmem:[%s6] sm:$0xff]
        %v521 = vld [vmem:[%s6 + $0x8] sm:$0xff]
        %v522 = vld [vmem:[%s6 + $0x10] sm:$0xff]
        %v523 = vld [vmem:[%s6 + $0x18] sm:$0xff]
        %v524 = vld [vmem:[#allocation2] sm:$0x3]
        %vm525 = vcmask 261120
        %v527 = vsel %vm525, %v524, 0
        %529 = vmatprep.subr.mxu0 0.0
        %530 = vmatpush1.msra.mxu0 %v516
        %531 = vmatprep.subr.mxu0 0.0
        %532 = vmatpush1.msra.mxu0 %v517
        %533 = vmatprep.subr.mxu0 0.0
        %534 = vmatpush1.msra.mxu0 %v518
        %535 = vmatprep.subr.mxu0 0.0
        %536 = vmatpush1.msra.mxu0 %v519
        %537 = vmatprep.subr.mxu0 0.0
        %538 = vmatpush1.msra.mxu0 0.0
        %539 = vmatprep.subr.mxu0 0.0
        %540 = vmatpush1.msra.mxu0 0.0
        %541 = vmatprep.subr.mxu0 0.0
        %542 = vmatpush1.msra.mxu0 0.0
        %543 = vmatprep.subr.mxu0 0.0
        %544 = vmatpush1.msra.mxu0 0.0
        %545 = vmatprep.subr.mxu0 0.0
        %546 = vmatpush1.msra.mxu0 0.0
        %547 = vmatprep.subr.mxu0 0.0
        %548 = vmatpush1.msra.mxu0 0.0
        %549 = vmatprep.subr.mxu0 0.0
        %550 = vmatpush1.msra.mxu0 0.0
        %551 = vmatprep.subr.mxu0 0.0
        %552 = vmatpush1.msra.mxu0 0.0
        %553 = vmatprep.subr.mxu0 0.0
        %554 = vmatpush1.msra.mxu0 0.0
        %555 = vmatprep.subr.mxu0 0.0
        %556 = vmatpush1.msra.mxu0 0.0
        %557 = vmatprep.subr.mxu0 0.0
        %558 = vmatpush1.msra.mxu0 0.0
        %559 = vmatprep.subr.mxu0 0.0
        %560 = vmatpush1.msra.mxu0 0.0
        %561 = vmatprep.subr.mxu0 0.0
        %562 = vmatpush1.msra.mxu0 0.0
        %563 = vmatprep.subr.mxu0 0.0
        %564 = vmatpush1.msra.mxu0 0.0
        %565 = vmatprep.subr.mxu0 0.0
        %566 = vmatpush1.msra.mxu0 0.0
        %567 = vmatprep.subr.mxu0 0.0
        %568 = vmatpush1.msra.mxu0 0.0
        %569 = vmatprep.subr.mxu0 0.0
        %570 = vmatpush1.msra.mxu0 0.0
        %571 = vmatprep.subr.mxu0 0.0
        %572 = vmatpush1.msra.mxu0 0.0
        %573 = vmatprep.subr.mxu0 0.0
        %574 = vmatpush1.msra.mxu0 0.0
        %575 = vmatprep.subr.mxu0 0.0
        %576 = vmatpush1.msra.mxu0 0.0
        %577 = vmatprep.subr.mxu0 0.0
        %578 = vmatpush1.msra.mxu0 0.0
        %579 = vmatprep.subr.mxu0 0.0
        %580 = vmatpush1.msra.mxu0 0.0
        %581 = vmatprep.subr.mxu0 0.0
        %582 = vmatpush1.msra.mxu0 0.0
        %583 = vmatprep.subr.mxu0 0.0
        %584 = vmatpush1.msra.mxu0 0.0
        %585 = vmatprep.subr.mxu0 0.0
        %586 = vmatpush1.msra.mxu0 0.0
        %587 = vmatprep.subr.mxu0 0.0
        %588 = vmatpush1.msra.mxu0 0.0
        %589 = vmatprep.subr.mxu0 0.0
        %590 = vmatpush1.msra.mxu0 0.0
        %591 = vmatprep.subr.mxu0 0.0
        %592 = vmatpush1.msra.mxu0 0.0
        %593 = vmatprep.mubr.f32.mxu0 0.0
        %594 = vmatmul.mubr.f32.gmra.mrb[0].mxu0 %v527
        %v595 = vpop.f32.mrb[0].mxu0
        %v596 = vadd.f32 %v401, %v595
        %v597 = vpop.f32.mrb[0].mxu0
        %598 = vdwg.mxu0
        %v599 = vxor.u32 %v596, 2147483648
        %v600 = vmul.f32 %v599, 1.442695
        %v601 = vpow.pop %v600
        %v602 = vadd.f32 %v601, 1.0
        %v603 = vrcp.pop %v602
        %v604 = vmul.f32 1.0, %v603
        %605 = vrot.lane.b32.xlu0 %v524, 32
        %v606 = vpop.permute.xlu0 %605
        %v608 = vmul.f32 %v604, %v606
        %610 = vrot.lane.b32.xlu0 %v608, 96
        %v611 = vpop.permute.xlu0 %610
        %v612 = vsel %vm525, %v611, 0
        %614 = vmatprep.subr.mxu0 0.0
        %615 = vmatpush1.msra.mxu0 %v520
        %616 = vmatprep.subr.mxu0 0.0
        %617 = vmatpush1.msra.mxu0 %v521
        %618 = vmatprep.subr.mxu0 0.0
        %619 = vmatpush1.msra.mxu0 %v522
        %620 = vmatprep.subr.mxu0 0.0
        %621 = vmatpush1.msra.mxu0 %v523
        %622 = vmatprep.subr.mxu0 0.0
        %623 = vmatpush1.msra.mxu0 0.0
        %624 = vmatprep.subr.mxu0 0.0
        %625 = vmatpush1.msra.mxu0 0.0
        %626 = vmatprep.subr.mxu0 0.0
        %627 = vmatpush1.msra.mxu0 0.0
        %628 = vmatprep.subr.mxu0 0.0
        %629 = vmatpush1.msra.mxu0 0.0
        %630 = vmatprep.subr.mxu0 0.0
        %631 = vmatpush1.msra.mxu0 0.0
        %632 = vmatprep.subr.mxu0 0.0
        %633 = vmatpush1.msra.mxu0 0.0
        %634 = vmatprep.subr.mxu0 0.0
        %635 = vmatpush1.msra.mxu0 0.0
        %636 = vmatprep.subr.mxu0 0.0
        %637 = vmatpush1.msra.mxu0 0.0
        %638 = vmatprep.subr.mxu0 0.0
        %639 = vmatpush1.msra.mxu0 0.0
        %640 = vmatprep.subr.mxu0 0.0
        %641 = vmatpush1.msra.mxu0 0.0
        %642 = vmatprep.subr.mxu0 0.0
        %643 = vmatpush1.msra.mxu0 0.0
        %644 = vmatprep.subr.mxu0 0.0
        %645 = vmatpush1.msra.mxu0 0.0
        %646 = vmatprep.subr.mxu0 0.0
        %647 = vmatpush1.msra.mxu0 0.0
        %648 = vmatprep.subr.mxu0 0.0
        %649 = vmatpush1.msra.mxu0 0.0
        %650 = vmatprep.subr.mxu0 0.0
        %651 = vmatpush1.msra.mxu0 0.0
        %652 = vmatprep.subr.mxu0 0.0
        %653 = vmatpush1.msra.mxu0 0.0
        %654 = vmatprep.subr.mxu0 0.0
        %655 = vmatpush1.msra.mxu0 0.0
        %656 = vmatprep.subr.mxu0 0.0
        %657 = vmatpush1.msra.mxu0 0.0
        %658 = vmatprep.subr.mxu0 0.0
        %659 = vmatpush1.msra.mxu0 0.0
        %660 = vmatprep.subr.mxu0 0.0
        %661 = vmatpush1.msra.mxu0 0.0
        %662 = vmatprep.subr.mxu0 0.0
        %663 = vmatpush1.msra.mxu0 0.0
        %664 = vmatprep.subr.mxu0 0.0
        %665 = vmatpush1.msra.mxu0 0.0
        %666 = vmatprep.subr.mxu0 0.0
        %667 = vmatpush1.msra.mxu0 0.0
        %668 = vmatprep.subr.mxu0 0.0
        %669 = vmatpush1.msra.mxu0 0.0
        %670 = vmatprep.subr.mxu0 0.0
        %671 = vmatpush1.msra.mxu0 0.0
        %672 = vmatprep.subr.mxu0 0.0
        %673 = vmatpush1.msra.mxu0 0.0
        %674 = vmatprep.subr.mxu0 0.0
        %675 = vmatpush1.msra.mxu0 0.0
        %676 = vmatprep.subr.mxu0 0.0
        %677 = vmatpush1.msra.mxu0 0.0
        %678 = vmatprep.mubr.f32.mxu0 0.0
        %679 = vmatmul.mubr.f32.gmra.mrb[0].mxu0 %v612
        %v680 = vpop.f32.mrb[0].mxu0
        %v681 = vadd.f32 %v502, %v680
        %v682 = vpop.f32.mrb[0].mxu0
        %683 = vdwg.mxu0
        %v684 = vtanh.pop %v681
        %v685 = vsub.f32 %v684, %v524
        %v686 = vmul.f32 %v604, %v685
        %v687 = vadd.f32 %v524, %v686
        %vm688 = vcmask 254976
        %689 = vst.msk [vmem:[%s272] sm:$0x3] %vm688, %v687
        %v691 = vsel %vm525, %v687, 0
        %693 = vmatprep.subr.mxu0 0.0
        %694 = vmatpush1.msra.mxu0 %v516
        %695 = vmatprep.subr.mxu0 0.0
        %696 = vmatpush1.msra.mxu0 %v517
        %697 = vmatprep.subr.mxu0 0.0
        %698 = vmatpush1.msra.mxu0 %v518
        %699 = vmatprep.subr.mxu0 0.0
        %700 = vmatpush1.msra.mxu0 %v519
        %701 = vmatprep.subr.mxu0 0.0
        %702 = vmatpush1.msra.mxu0 0.0
        %703 = vmatprep.subr.mxu0 0.0
        %704 = vmatpush1.msra.mxu0 0.0
        %705 = vmatprep.subr.mxu0 0.0
        %706 = vmatpush1.msra.mxu0 0.0
        %707 = vmatprep.subr.mxu0 0.0
        %708 = vmatpush1.msra.mxu0 0.0
        %709 = vmatprep.subr.mxu0 0.0
        %710 = vmatpush1.msra.mxu0 0.0
        %711 = vmatprep.subr.mxu0 0.0
        %712 = vmatpush1.msra.mxu0 0.0
        %713 = vmatprep.subr.mxu0 0.0
        %714 = vmatpush1.msra.mxu0 0.0
        %715 = vmatprep.subr.mxu0 0.0
        %716 = vmatpush1.msra.mxu0 0.0
        %717 = vmatprep.subr.mxu0 0.0
        %718 = vmatpush1.msra.mxu0 0.0
        %719 = vmatprep.subr.mxu0 0.0
        %720 = vmatpush1.msra.mxu0 0.0
        %721 = vmatprep.subr.mxu0 0.0
        %722 = vmatpush1.msra.mxu0 0.0
        %723 = vmatprep.subr.mxu0 0.0
        %724 = vmatpush1.msra.mxu0 0.0
        %725 = vmatprep.subr.mxu0 0.0
        %726 = vmatpush1.msra.mxu0 0.0
        %727 = vmatprep.subr.mxu0 0.0
        %728 = vmatpush1.msra.mxu0 0.0
        %729 = vmatprep.subr.mxu0 0.0
        %730 = vmatpush1.msra.mxu0 0.0
        %731 = vmatprep.subr.mxu0 0.0
        %732 = vmatpush1.msra.mxu0 0.0
        %733 = vmatprep.subr.mxu0 0.0
        %734 = vmatpush1.msra.mxu0 0.0
        %735 = vmatprep.subr.mxu0 0.0
        %736 = vmatpush1.msra.mxu0 0.0
        %737 = vmatprep.subr.mxu0 0.0
        %738 = vmatpush1.msra.mxu0 0.0
        %739 = vmatprep.subr.mxu0 0.0
        %740 = vmatpush1.msra.mxu0 0.0
        %741 = vmatprep.subr.mxu0 0.0
        %742 = vmatpush1.msra.mxu0 0.0
        %743 = vmatprep.subr.mxu0 0.0
        %744 = vmatpush1.msra.mxu0 0.0
        %745 = vmatprep.subr.mxu0 0.0
        %746 = vmatpush1.msra.mxu0 0.0
        %747 = vmatprep.subr.mxu0 0.0
        %748 = vmatpush1.msra.mxu0 0.0
        %749 = vmatprep.subr.mxu0 0.0
        %750 = vmatpush1.msra.mxu0 0.0
        %751 = vmatprep.subr.mxu0 0.0
        %752 = vmatpush1.msra.mxu0 0.0
        %753 = vmatprep.subr.mxu0 0.0
        %754 = vmatpush1.msra.mxu0 0.0
        %755 = vmatprep.subr.mxu0 0.0
        %756 = vmatpush1.msra.mxu0 0.0
        %757 = vmatprep.mubr.f32.mxu0 0.0
        %758 = vmatmul.mubr.f32.gmra.mrb[0].mxu0 %v691
        %v759 = vpop.f32.mrb[0].mxu0
        %v760 = vadd.f32 %v409, %v759
        %v761 = vpop.f32.mrb[0].mxu0
        %762 = vdwg.mxu0
        %v763 = vxor.u32 %v760, 2147483648
        %v764 = vmul.f32 %v763, 1.442695
        %v765 = vpow.pop %v764
        %v766 = vadd.f32 %v765, 1.0
        %v767 = vrcp.pop %v766
        %v768 = vmul.f32 1.0, %v767
        %769 = vrot.lane.b32.xlu0 %v687, 32
        %v770 = vpop.permute.xlu0 %769
        %v772 = vmul.f32 %v768, %v770
        %774 = vrot.lane.b32.xlu0 %v772, 96
        %v775 = vpop.permute.xlu0 %774
        %v776 = vsel %vm525, %v775, 0
        %778 = vmatprep.subr.mxu0 0.0
        %779 = vmatpush1.msra.mxu0 %v520
        %780 = vmatprep.subr.mxu0 0.0
        %781 = vmatpush1.msra.mxu0 %v521
        %782 = vmatprep.subr.mxu0 0.0
        %783 = vmatpush1.msra.mxu0 %v522
        %784 = vmatprep.subr.mxu0 0.0
        %785 = vmatpush1.msra.mxu0 %v523
        %786 = vmatprep.subr.mxu0 0.0
        %787 = vmatpush1.msra.mxu0 0.0
        %788 = vmatprep.subr.mxu0 0.0
        %789 = vmatpush1.msra.mxu0 0.0
        %790 = vmatprep.subr.mxu0 0.0
        %791 = vmatpush1.msra.mxu0 0.0
        %792 = vmatprep.subr.mxu0 0.0
        %793 = vmatpush1.msra.mxu0 0.0
        %794 = vmatprep.subr.mxu0 0.0
        %795 = vmatpush1.msra.mxu0 0.0
        %796 = vmatprep.subr.mxu0 0.0
        %797 = vmatpush1.msra.mxu0 0.0
        %798 = vmatprep.subr.mxu0 0.0
        %799 = vmatpush1.msra.mxu0 0.0
        %800 = vmatprep.subr.mxu0 0.0
        %801 = vmatpush1.msra.mxu0 0.0
        %802 = vmatprep.subr.mxu0 0.0
        %803 = vmatpush1.msra.mxu0 0.0
        %804 = vmatprep.subr.mxu0 0.0
        %805 = vmatpush1.msra.mxu0 0.0
        %806 = vmatprep.subr.mxu0 0.0
        %807 = vmatpush1.msra.mxu0 0.0
        %808 = vmatprep.subr.mxu0 0.0
        %809 = vmatpush1.msra.mxu0 0.0
        %810 = vmatprep.subr.mxu0 0.0
        %811 = vmatpush1.msra.mxu0 0.0
        %812 = vmatprep.subr.mxu0 0.0
        %813 = vmatpush1.msra.mxu0 0.0
        %814 = vmatprep.subr.mxu0 0.0
        %815 = vmatpush1.msra.mxu0 0.0
        %816 = vmatprep.subr.mxu0 0.0
        %817 = vmatpush1.msra.mxu0 0.0
        %818 = vmatprep.subr.mxu0 0.0
        %819 = vmatpush1.msra.mxu0 0.0
        %820 = vmatprep.subr.mxu0 0.0
        %821 = vmatpush1.msra.mxu0 0.0
        %822 = vmatprep.subr.mxu0 0.0
        %823 = vmatpush1.msra.mxu0 0.0
        %824 = vmatprep.subr.mxu0 0.0
        %825 = vmatpush1.msra.mxu0 0.0
        %826 = vmatprep.subr.mxu0 0.0
        %827 = vmatpush1.msra.mxu0 0.0
        %828 = vmatprep.subr.mxu0 0.0
        %829 = vmatpush1.msra.mxu0 0.0
        %830 = vmatprep.subr.mxu0 0.0
        %831 = vmatpush1.msra.mxu0 0.0
        %832 = vmatprep.subr.mxu0 0.0
        %833 = vmatpush1.msra.mxu0 0.0
        %834 = vmatprep.subr.mxu0 0.0
        %835 = vmatpush1.msra.mxu0 0.0
        %836 = vmatprep.subr.mxu0 0.0
        %837 = vmatpush1.msra.mxu0 0.0
        %838 = vmatprep.subr.mxu0 0.0
        %839 = vmatpush1.msra.mxu0 0.0
        %840 = vmatprep.subr.mxu0 0.0
        %841 = vmatpush1.msra.mxu0 0.0
        %842 = vmatprep.mubr.f32.mxu0 0.0
        %843 = vmatmul.mubr.f32.gmra.mrb[0].mxu0 %v776
        %v844 = vpop.f32.mrb[0].mxu0
        %v845 = vadd.f32 %v510, %v844
        %v846 = vpop.f32.mrb[0].mxu0
        %847 = vdwg.mxu0
        %v848 = vtanh.pop %v845
        %v849 = vsub.f32 %v848, %v687
        %v850 = vmul.f32 %v768, %v849
        %v851 = vadd.f32 %v687, %v850
        %s852 = scalar_lea.vmem %s272, 2 [#allocation3]
        %853 = vst.msk [vmem:[%s852] sm:$0x3] %vm688, %v851
        %v855 = vsel %vm525, %v851, 0
        %857 = vmatprep.subr.mxu0 0.0
        %858 = vmatpush1.msra.mxu0 %v516
        %859 = vmatprep.subr.mxu0 0.0
        %860 = vmatpush1.msra.mxu0 %v517
        %861 = vmatprep.subr.mxu0 0.0
        %862 = vmatpush1.msra.mxu0 %v518
        %863 = vmatprep.subr.mxu0 0.0
        %864 = vmatpush1.msra.mxu0 %v519
        %865 = vmatprep.subr.mxu0 0.0
        %866 = vmatpush1.msra.mxu0 0.0
        %867 = vmatprep.subr.mxu0 0.0
        %868 = vmatpush1.msra.mxu0 0.0
        %869 = vmatprep.subr.mxu0 0.0
        %870 = vmatpush1.msra.mxu0 0.0
        %871 = vmatprep.subr.mxu0 0.0
        %872 = vmatpush1.msra.mxu0 0.0
        %873 = vmatprep.subr.mxu0 0.0
        %874 = vmatpush1.msra.mxu0 0.0
        %875 = vmatprep.subr.mxu0 0.0
        %876 = vmatpush1.msra.mxu0 0.0
        %877 = vmatprep.subr.mxu0 0.0
        %878 = vmatpush1.msra.mxu0 0.0
        %879 = vmatprep.subr.mxu0 0.0
        %880 = vmatpush1.msra.mxu0 0.0
        %881 = vmatprep.subr.mxu0 0.0
        %882 = vmatpush1.msra.mxu0 0.0
        %883 = vmatprep.subr.mxu0 0.0
        %884 = vmatpush1.msra.mxu0 0.0
        %885 = vmatprep.subr.mxu0 0.0
        %886 = vmatpush1.msra.mxu0 0.0
        %887 = vmatprep.subr.mxu0 0.0
        %888 = vmatpush1.msra.mxu0 0.0
        %889 = vmatprep.subr.mxu0 0.0
        %890 = vmatpush1.msra.mxu0 0.0
        %891 = vmatprep.subr.mxu0 0.0
        %892 = vmatpush1.msra.mxu0 0.0
        %893 = vmatprep.subr.mxu0 0.0
        %894 = vmatpush1.msra.mxu0 0.0
        %895 = vmatprep.subr.mxu0 0.0
        %896 = vmatpush1.msra.mxu0 0.0
        %897 = vmatprep.subr.mxu0 0.0
        %898 = vmatpush1.msra.mxu0 0.0
        %899 = vmatprep.subr.mxu0 0.0
        %900 = vmatpush1.msra.mxu0 0.0
        %901 = vmatprep.subr.mxu0 0.0
        %902 = vmatpush1.msra.mxu0 0.0
        %903 = vmatprep.subr.mxu0 0.0
        %904 = vmatpush1.msra.mxu0 0.0
        %905 = vmatprep.subr.mxu0 0.0
        %906 = vmatpush1.msra.mxu0 0.0
        %907 = vmatprep.subr.mxu0 0.0
        %908 = vmatpush1.msra.mxu0 0.0
        %909 = vmatprep.subr.mxu0 0.0
        %910 = vmatpush1.msra.mxu0 0.0
        %911 = vmatprep.subr.mxu0 0.0
        %912 = vmatpush1.msra.mxu0 0.0
        %913 = vmatprep.subr.mxu0 0.0
        %914 = vmatpush1.msra.mxu0 0.0
        %915 = vmatprep.subr.mxu0 0.0
        %916 = vmatpush1.msra.mxu0 0.0
        %917 = vmatprep.subr.mxu0 0.0
        %918 = vmatpush1.msra.mxu0 0.0
        %919 = vmatprep.subr.mxu0 0.0
        %920 = vmatpush1.msra.mxu0 0.0
        %921 = vmatprep.mubr.f32.mxu0 0.0
        %922 = vmatmul.mubr.f32.gmra.mrb[0].mxu0 %v855
        %v923 = vpop.f32.mrb[0].mxu0
        %v924 = vadd.f32 %v408, %v923
        %v925 = vpop.f32.mrb[0].mxu0
        %926 = vdwg.mxu0
        %v927 = vxor.u32 %v924, 2147483648
        %v928 = vmul.f32 %v927, 1.442695
        %v929 = vpow.pop %v928
        %v930 = vadd.f32 %v929, 1.0
        %v931 = vrcp.pop %v930
        %v932 = vmul.f32 1.0, %v931
        %933 = vrot.lane.b32.xlu0 %v851, 32
        %v934 = vpop.permute.xlu0 %933
        %v936 = vmul.f32 %v932, %v934
        %938 = vrot.lane.b32.xlu0 %v936, 96
        %v939 = vpop.permute.xlu0 %938
        %v940 = vsel %vm525, %v939, 0
        %942 = vmatprep.subr.mxu0 0.0
        %943 = vmatpush1.msra.mxu0 %v520
        %944 = vmatprep.subr.mxu0 0.0
        %945 = vmatpush1.msra.mxu0 %v521
        %946 = vmatprep.subr.mxu0 0.0
        %947 = vmatpush1.msra.mxu0 %v522
        %948 = vmatprep.subr.mxu0 0.0
        %949 = vmatpush1.msra.mxu0 %v523
        %950 = vmatprep.subr.mxu0 0.0
        %951 = vmatpush1.msra.mxu0 0.0
        %952 = vmatprep.subr.mxu0 0.0
        %953 = vmatpush1.msra.mxu0 0.0
        %954 = vmatprep.subr.mxu0 0.0
        %955 = vmatpush1.msra.mxu0 0.0
        %956 = vmatprep.subr.mxu0 0.0
        %957 = vmatpush1.msra.mxu0 0.0
        %958 = vmatprep.subr.mxu0 0.0
        %959 = vmatpush1.msra.mxu0 0.0
        %960 = vmatprep.subr.mxu0 0.0
        %961 = vmatpush1.msra.mxu0 0.0
        %962 = vmatprep.subr.mxu0 0.0
        %963 = vmatpush1.msra.mxu0 0.0
        %964 = vmatprep.subr.mxu0 0.0
        %965 = vmatpush1.msra.mxu0 0.0
        %966 = vmatprep.subr.mxu0 0.0
        %967 = vmatpush1.msra.mxu0 0.0
        %968 = vmatprep.subr.mxu0 0.0
        %969 = vmatpush1.msra.mxu0 0.0
        %970 = vmatprep.subr.mxu0 0.0
        %971 = vmatpush1.msra.mxu0 0.0
        %972 = vmatprep.subr.mxu0 0.0
        %973 = vmatpush1.msra.mxu0 0.0
        %974 = vmatprep.subr.mxu0 0.0
        %975 = vmatpush1.msra.mxu0 0.0
        %976 = vmatprep.subr.mxu0 0.0
        %977 = vmatpush1.msra.mxu0 0.0
        %978 = vmatprep.subr.mxu0 0.0
        %979 = vmatpush1.msra.mxu0 0.0
        %980 = vmatprep.subr.mxu0 0.0
        %981 = vmatpush1.msra.mxu0 0.0
        %982 = vmatprep.subr.mxu0 0.0
        %983 = vmatpush1.msra.mxu0 0.0
        %984 = vmatprep.subr.mxu0 0.0
        %985 = vmatpush1.msra.mxu0 0.0
        %986 = vmatprep.subr.mxu0 0.0
        %987 = vmatpush1.msra.mxu0 0.0
        %988 = vmatprep.subr.mxu0 0.0
        %989 = vmatpush1.msra.mxu0 0.0
        %990 = vmatprep.subr.mxu0 0.0
        %991 = vmatpush1.msra.mxu0 0.0
        %992 = vmatprep.subr.mxu0 0.0
        %993 = vmatpush1.msra.mxu0 0.0
        %994 = vmatprep.subr.mxu0 0.0
        %995 = vmatpush1.msra.mxu0 0.0
        %996 = vmatprep.subr.mxu0 0.0
        %997 = vmatpush1.msra.mxu0 0.0
        %998 = vmatprep.subr.mxu0 0.0
        %999 = vmatpush1.msra.mxu0 0.0
        %1000 = vmatprep.subr.mxu0 0.0
        %1001 = vmatpush1.msra.mxu0 0.0
        %1002 = vmatprep.subr.mxu0 0.0
        %1003 = vmatpush1.msra.mxu0 0.0
        %1004 = vmatprep.subr.mxu0 0.0
        %1005 = vmatpush1.msra.mxu0 0.0
        %1006 = vmatprep.mubr.f32.mxu0 0.0
        %1007 = vmatmul.mubr.f32.gmra.mrb[0].mxu0 %v940
        %v1008 = vpop.f32.mrb[0].mxu0
        %v1009 = vadd.f32 %v509, %v1008
        %v1010 = vpop.f32.mrb[0].mxu0
        %1011 = vdwg.mxu0
        %v1012 = vtanh.pop %v1009
        %v1013 = vsub.f32 %v1012, %v851
        %v1014 = vmul.f32 %v932, %v1013
        %v1015 = vadd.f32 %v851, %v1014
        %s1016 = scalar_lea.vmem %s272, 4 [#allocation3]
        %1017 = vst.msk [vmem:[%s1016] sm:$0x3] %vm688, %v1015
        %v1019 = vsel %vm525, %v1015, 0
        %1021 = vmatprep.subr.mxu0 0.0
        %1022 = vmatpush1.msra.mxu0 %v516
        %1023 = vmatprep.subr.mxu0 0.0
        %1024 = vmatpush1.msra.mxu0 %v517
        %1025 = vmatprep.subr.mxu0 0.0
        %1026 = vmatpush1.msra.mxu0 %v518
        %1027 = vmatprep.subr.mxu0 0.0
        %1028 = vmatpush1.msra.mxu0 %v519
        %1029 = vmatprep.subr.mxu0 0.0
        %1030 = vmatpush1.msra.mxu0 0.0
        %1031 = vmatprep.subr.mxu0 0.0
        %1032 = vmatpush1.msra.mxu0 0.0
        %1033 = vmatprep.subr.mxu0 0.0
        %1034 = vmatpush1.msra.mxu0 0.0
        %1035 = vmatprep.subr.mxu0 0.0
        %1036 = vmatpush1.msra.mxu0 0.0
        %1037 = vmatprep.subr.mxu0 0.0
        %1038 = vmatpush1.msra.mxu0 0.0
        %1039 = vmatprep.subr.mxu0 0.0
        %1040 = vmatpush1.msra.mxu0 0.0
        %1041 = vmatprep.subr.mxu0 0.0
        %1042 = vmatpush1.msra.mxu0 0.0
        %1043 = vmatprep.subr.mxu0 0.0
        %1044 = vmatpush1.msra.mxu0 0.0
        %1045 = vmatprep.subr.mxu0 0.0
        %1046 = vmatpush1.msra.mxu0 0.0
        %1047 = vmatprep.subr.mxu0 0.0
        %1048 = vmatpush1.msra.mxu0 0.0
        %1049 = vmatprep.subr.mxu0 0.0
        %1050 = vmatpush1.msra.mxu0 0.0
        %1051 = vmatprep.subr.mxu0 0.0
        %1052 = vmatpush1.msra.mxu0 0.0
        %1053 = vmatprep.subr.mxu0 0.0
        %1054 = vmatpush1.msra.mxu0 0.0
        %1055 = vmatprep.subr.mxu0 0.0
        %1056 = vmatpush1.msra.mxu0 0.0
        %1057 = vmatprep.subr.mxu0 0.0
        %1058 = vmatpush1.msra.mxu0 0.0
        %1059 = vmatprep.subr.mxu0 0.0
        %1060 = vmatpush1.msra.mxu0 0.0
        %1061 = vmatprep.subr.mxu0 0.0
        %1062 = vmatpush1.msra.mxu0 0.0
        %1063 = vmatprep.subr.mxu0 0.0
        %1064 = vmatpush1.msra.mxu0 0.0
        %1065 = vmatprep.subr.mxu0 0.0
        %1066 = vmatpush1.msra.mxu0 0.0
        %1067 = vmatprep.subr.mxu0 0.0
        %1068 = vmatpush1.msra.mxu0 0.0
        %1069 = vmatprep.subr.mxu0 0.0
        %1070 = vmatpush1.msra.mxu0 0.0
        %1071 = vmatprep.subr.mxu0 0.0
        %1072 = vmatpush1.msra.mxu0 0.0
        %1073 = vmatprep.subr.mxu0 0.0
        %1074 = vmatpush1.msra.mxu0 0.0
        %1075 = vmatprep.subr.mxu0 0.0
        %1076 = vmatpush1.msra.mxu0 0.0
        %1077 = vmatprep.subr.mxu0 0.0
        %1078 = vmatpush1.msra.mxu0 0.0
        %1079 = vmatprep.subr.mxu0 0.0
        %1080 = vmatpush1.msra.mxu0 0.0
        %1081 = vmatprep.subr.mxu0 0.0
        %1082 = vmatpush1.msra.mxu0 0.0
        %1083 = vmatprep.subr.mxu0 0.0
        %1084 = vmatpush1.msra.mxu0 0.0
        %1085 = vmatprep.mubr.f32.mxu0 0.0
        %1086 = vmatmul.mubr.f32.gmra.mrb[0].mxu0 %v1019
        %v1087 = vpop.f32.mrb[0].mxu0
        %v1088 = vadd.f32 %v410, %v1087
        %v1089 = vpop.f32.mrb[0].mxu0
        %1090 = vdwg.mxu0
        %v1091 = vxor.u32 %v1088, 2147483648
        %v1092 = vmul.f32 %v1091, 1.442695
        %v1093 = vpow.pop %v1092
        %v1094 = vadd.f32 %v1093, 1.0
        %v1095 = vrcp.pop %v1094
        %v1096 = vmul.f32 1.0, %v1095
        %1097 = vrot.lane.b32.xlu0 %v1015, 32
        %v1098 = vpop.permute.xlu0 %1097
        %v1100 = vmul.f32 %v1096, %v1098
        %1102 = vrot.lane.b32.xlu0 %v1100, 96
        %v1103 = vpop.permute.xlu0 %1102
        %v1104 = vsel %vm525, %v1103, 0
        %1106 = vmatprep.subr.mxu0 0.0
        %1107 = vmatpush1.msra.mxu0 %v520
        %1108 = vmatprep.subr.mxu0 0.0
        %1109 = vmatpush1.msra.mxu0 %v521
        %1110 = vmatprep.subr.mxu0 0.0
        %1111 = vmatpush1.msra.mxu0 %v522
        %1112 = vmatprep.subr.mxu0 0.0
        %1113 = vmatpush1.msra.mxu0 %v523
        %1114 = vmatprep.subr.mxu0 0.0
        %1115 = vmatpush1.msra.mxu0 0.0
        %1116 = vmatprep.subr.mxu0 0.0
        %1117 = vmatpush1.msra.mxu0 0.0
        %1118 = vmatprep.subr.mxu0 0.0
        %1119 = vmatpush1.msra.mxu0 0.0
        %1120 = vmatprep.subr.mxu0 0.0
        %1121 = vmatpush1.msra.mxu0 0.0
        %1122 = vmatprep.subr.mxu0 0.0
        %1123 = vmatpush1.msra.mxu0 0.0
        %1124 = vmatprep.subr.mxu0 0.0
        %1125 = vmatpush1.msra.mxu0 0.0
        %1126 = vmatprep.subr.mxu0 0.0
        %1127 = vmatpush1.msra.mxu0 0.0
        %1128 = vmatprep.subr.mxu0 0.0
        %1129 = vmatpush1.msra.mxu0 0.0
        %1130 = vmatprep.subr.mxu0 0.0
        %1131 = vmatpush1.msra.mxu0 0.0
        %1132 = vmatprep.subr.mxu0 0.0
        %1133 = vmatpush1.msra.mxu0 0.0
        %1134 = vmatprep.subr.mxu0 0.0
        %1135 = vmatpush1.msra.mxu0 0.0
        %1136 = vmatprep.subr.mxu0 0.0
        %1137 = vmatpush1.msra.mxu0 0.0
        %1138 = vmatprep.subr.mxu0 0.0
        %1139 = vmatpush1.msra.mxu0 0.0
        %1140 = vmatprep.subr.mxu0 0.0
        %1141 = vmatpush1.msra.mxu0 0.0
        %1142 = vmatprep.subr.mxu0 0.0
        %1143 = vmatpush1.msra.mxu0 0.0
        %1144 = vmatprep.subr.mxu0 0.0
        %1145 = vmatpush1.msra.mxu0 0.0
        %1146 = vmatprep.subr.mxu0 0.0
        %1147 = vmatpush1.msra.mxu0 0.0
        %1148 = vmatprep.subr.mxu0 0.0
        %1149 = vmatpush1.msra.mxu0 0.0
        %1150 = vmatprep.subr.mxu0 0.0
        %1151 = vmatpush1.msra.mxu0 0.0
        %1152 = vmatprep.subr.mxu0 0.0
        %1153 = vmatpush1.msra.mxu0 0.0
        %1154 = vmatprep.subr.mxu0 0.0
        %1155 = vmatpush1.msra.mxu0 0.0
        %1156 = vmatprep.subr.mxu0 0.0
        %1157 = vmatpush1.msra.mxu0 0.0
        %1158 = vmatprep.subr.mxu0 0.0
        %1159 = vmatpush1.msra.mxu0 0.0
        %1160 = vmatprep.subr.mxu0 0.0
        %1161 = vmatpush1.msra.mxu0 0.0
        %1162 = vmatprep.subr.mxu0 0.0
        %1163 = vmatpush1.msra.mxu0 0.0
        %1164 = vmatprep.subr.mxu0 0.0
        %1165 = vmatpush1.msra.mxu0 0.0
        %1166 = vmatprep.subr.mxu0 0.0
        %1167 = vmatpush1.msra.mxu0 0.0
        %1168 = vmatprep.subr.mxu0 0.0
        %1169 = vmatpush1.msra.mxu0 0.0
        %1170 = vmatprep.mubr.f32.mxu0 0.0
        %1171 = vmatmul.mubr.f32.gmra.mrb[0].mxu0 %v1104
        %v1172 = vpop.f32.mrb[0].mxu0
        %v1173 = vadd.f32 %v511, %v1172
        %v1174 = vpop.f32.mrb[0].mxu0
        %1175 = vdwg.mxu0
        %v1176 = vtanh.pop %v1173
        %v1177 = vsub.f32 %v1176, %v1015
        %v1178 = vmul.f32 %v1096, %v1177
        %v1179 = vadd.f32 %v1015, %v1178
        %s1180 = scalar_lea.vmem %s272, 6 [#allocation3]
        %1181 = vst.msk [vmem:[%s1180] sm:$0x3] %vm688, %v1179
        %1182 = vst.msk [vmem:[#allocation2] sm:$0x3] %vm688, %v1179
        %s1183 = sand.u32 %s181, 1
        %s1184 = scalar_lea.sflag [#allocation4], %s1183
        %s1185 = sand.u32 %s181, 1
        %s1186 = smul.addr %s1185, 8
        %s1187 = scalar_lea.vmem [#allocation3], %s1186
        // Predicated region
        $region53: #{gru_forward.1} parent=47 // pred_check
          %p1188 = pneg %p191
        $region54: #{gru_forward.1} parent=47 // pred_check_branch
          %1190 = sbr.rel (%p1188) target = $region56
        $region55: #{gru_forward.1} parent=47 // pred_region
          %s1191 = smul.u32 4, %s21
          %s1193 = ssub.s32 128, 128
          %1194 = vsyncadd %s1184, %s1193
          %s1195 = smul.addr %s1191, 32
          %s1196 = scalar_lea.hbm %s7, %s1195
          %s1197 = sshll.u32 %s1187, 4
          %s1198 = int_to_ptr.vmem [resolvable:$true] %s1197
          %1203 = dma.vmem_to_hbm [thread:$0]  %s1198, 128, %s1196, %s1184, 32, 32, 2
        $region56: #{gru_forward.1} parent=47 // pred_fallthru
          _
      $region48: #{gru_forward.1} parent=5 // pred_fallthru
        _
      %p1204 = scmp.le.s32.totalorder 2, %s16
      // Predicated region
      $region57: #{gru_forward.1} parent=5 // pred_check
        %p1205 = pneg %p1204
      $region58: #{gru_forward.1} parent=5 // pred_check_branch
        %1207 = sbr.rel (%p1205) target = $region60
      $region59: #{gru_forward.1} parent=5 // pred_region
        %s1208 = ssub.s32 %s16, 2
        // Predicated region
        $region61: #{gru_forward.1} parent=59 // pred_check
          %p1209 = pneg %p197
        $region62: #{gru_forward.1} parent=59 // pred_check_branch
          %1211 = sbr.rel (%p1209) target = $region64
        $region63: #{gru_forward.1} parent=59 // pred_region
          %s1212 = sand.u32 %s182, 1
          %s1213 = scalar_lea.sflag [#allocation4], %s1212
          %s1214 = sand.u32 %s182, 1
          %s1215 = smul.addr %s1214, 8
          %s1216 = scalar_lea.vmem [#allocation3], %s1215
          %1217 = dma.done %s1213, 128
        $region64: #{gru_forward.1} parent=59 // pred_fallthru
          _
      $region60: #{gru_forward.1} parent=5 // pred_fallthru
        _
    $region6: #{gru_forward.1} parent=1 // loop_footer
      %s20 = sadd.s32 1, %s16
    $region7: #{gru_forward.1} parent=1 // loop_footer_branch
      %15 = sbr.rel target = $region3
    $region8: #{gru_forward.1} parent=1 // loop_exit
      _
    %1218 = vsyncpa [#allocation4], 1
    %s1219 = scalar_lea.sflag [#allocation4], 1
    %1220 = vsyncpa %s1219, 1

</llo_original>
